<compile_context>
chip_gen: v7x
topology: tpu7x:2x2x1
jax: 0.10.0
libtpu: 0.0.40
codegen_flags: <defaults>
</compile_context>

<pallas_src>
import functools
import math

import jax
import jax.numpy as jnp
from jax.experimental import pallas as pl
from jax.experimental.pallas import tpu as pltpu

NEG_INF = -1e9


def cross_mha_kernel(x_ref, y_ref, mask_ref, wq_ref, bq_ref, wkv_ref, bkv_ref,
                     wo_ref, bo_ref, o_ref, *, n_head, scale):
    x = x_ref[0]          # (Lq, H)
    y = y_ref[0]          # (Lk, H)
    mask = mask_ref[0]    # (1, Lk) or (Lq, Lk) — broadcasts against scores

    # Full-width projections.  torch nn.Linear weight is (out, in), so contract
    # over dim 1 of both operands (x @ W^T) — MXU handles trans_b natively.
    dn = (((1,), (1,)), ((), ()))
    q = jax.lax.dot_general(x, wq_ref[...], dn,
                            preferred_element_type=jnp.float32) + bq_ref[...]   # (Lq, H)
    kv = jax.lax.dot_general(y, wkv_ref[...], dn,
                             preferred_element_type=jnp.float32) + bkv_ref[...]  # (Lk, 2H)

    H = q.shape[-1]
    d_k = H // n_head
    k = kv[:, :H]   # (Lk, H)
    v = kv[:, H:]   # (Lk, H)

    # Per-head scaled dot-product attention (statically unrolled).
    ctx_heads = []
    for h in range(n_head):
        lo, hi = h * d_k, (h + 1) * d_k
        qh = q[:, lo:hi]                                                  # (Lq, d_k)
        kh = k[:, lo:hi]                                                  # (Lk, d_k)
        vh = v[:, lo:hi]                                                  # (Lk, d_k)

        s = jax.lax.dot_general(qh, kh, dn,
                                preferred_element_type=jnp.float32) * scale  # (Lq, Lk)
        s = jnp.where(mask == 0, NEG_INF, s)

        # Numerically-stable softmax; normalization deferred to after p @ v.
        m = jnp.max(s, axis=-1, keepdims=True)
        p = jnp.exp(s - m)
        l = jnp.sum(p, axis=-1, keepdims=True)                            # (Lq, 1)

        ctx_h = jnp.dot(p, vh, preferred_element_type=jnp.float32)        # (Lq, d_k)
        ctx_heads.append(ctx_h * pl.reciprocal(l, approx=False))

    ctx = jnp.concatenate(ctx_heads, axis=-1)                             # (Lq, H)

    # Single full-width output projection (K = H = 128).
    out = jax.lax.dot_general(ctx, wo_ref[...], dn,
                              preferred_element_type=jnp.float32) + bo_ref[...]
    o_ref[0] = out


def pack_params(params):
    """One-time packing (call once, outside the per-forward path).

    Weights stay in natural torch (out, in) layout; only K/V are concatenated
    (row-wise) so the kernel can do a fused N=2H projection, and biases are
    reshaped to (1, ...) rows.
    """
    H = params["wq"].shape[0]
    return {
        "wq": params["wq"],                                               # (H, H)
        "bq": params["bq"].reshape(1, H),
        "wkv": jnp.concatenate([params["wk"], params["wv"]], axis=0),     # (2H, H)
        "bkv": jnp.concatenate([params["bk"], params["bv"]]).reshape(1, 2 * H),
        "wo": params["wo"],                                               # (H, H)
        "bo": params["bo"].reshape(1, H),
    }


def cross_mha_forward(x, y, mask, packed, n_head):
    """x: (B, Lq, H); y: (B, Lk, H); mask: (B, 1, Lk) or (B, Lq, Lk)."""
    B, Lq, H = x.shape
    Lk = y.shape[1]
    d_k = H // n_head

    kernel = functools.partial(cross_mha_kernel, n_head=n_head,
                               scale=1.0 / math.sqrt(d_k))

    const2 = lambda b: (0, 0)
    return pl.pallas_call(
        kernel,
        out_shape=jax.ShapeDtypeStruct((B, Lq, H), jnp.float32),
        grid=(B,),
        in_specs=[
            pl.BlockSpec((1, Lq, H), lambda b: (b, 0, 0)),                # x
            pl.BlockSpec((1, Lk, H), lambda b: (b, 0, 0)),                # y
            pl.BlockSpec((1,) + mask.shape[1:], lambda b: (b, 0, 0)),     # mask
            pl.BlockSpec((H, H), const2),                                 # wq (resident)
            pl.BlockSpec((1, H), const2),                                 # bq
            pl.BlockSpec((2 * H, H), const2),                             # wkv (resident)
            pl.BlockSpec((1, 2 * H), const2),                             # bkv
            pl.BlockSpec((H, H), const2),                                 # wo (resident)
            pl.BlockSpec((1, H), const2),                                 # bo
        ],
        out_specs=pl.BlockSpec((1, Lq, H), lambda b: (b, 0, 0)),
        compiler_params=pltpu.CompilerParams(
            dimension_semantics=("parallel",)),
    )(x, y, mask, packed["wq"], packed["bq"], packed["wkv"], packed["bkv"],
      packed["wo"], packed["bo"])


def cross_mha_reference(x, y, mask, params, n_head):
    """Pure-JAX reference mirroring the PyTorch forward (eval mode)."""
    B, Lq, H = x.shape
    Lk = y.shape[1]
    d_k = H // n_head
    q = x @ params["wq"].T + params["bq"]
    k = y @ params["wk"].T + params["bk"]
    v = y @ params["wv"].T + params["bv"]
    q = q.reshape(B, Lq, n_head, d_k).transpose(0, 2, 1, 3)
    k = k.reshape(B, Lk, n_head, d_k).transpose(0, 2, 1, 3)
    v = v.reshape(B, Lk, n_head, d_k).transpose(0, 2, 1, 3)
    s = jnp.einsum("bhqd,bhkd->bhqk", q, k) / math.sqrt(d_k)
    s = jnp.where(mask[:, None, :, :] == 0, NEG_INF, s)   # mask (B,1,Lk) -> (B,1,1,Lk)
    p = jax.nn.softmax(s, axis=-1)
    ctx = jnp.einsum("bhqk,bhkd->bhqd", p, v)
    ctx = ctx.transpose(0, 2, 1, 3).reshape(B, Lq, H)
    return ctx @ params["wo"].T + params["bo"]


def make_params(key, n_hid):
    keys = jax.random.split(key, 8)
    bound = 1.0 / math.sqrt(n_hid)
    params = {}
    for i, name in enumerate(("q", "k", "v", "o")):
        params[f"w{name}"] = jax.random.uniform(
            keys[2 * i], (n_hid, n_hid), jnp.float32, -bound, bound)
        params[f"b{name}"] = jax.random.uniform(
            keys[2 * i + 1], (n_hid,), jnp.float32, -bound, bound)
    return params


if __name__ == "__main__":
    B, Lq, Lk = 2, 8, 16          # batch, query length, key/value length
    N_HEAD, N_HID = 4, 128        # heads, hidden (d_k = 32)

    key = jax.random.PRNGKey(0)
    kx, ky, kp = jax.random.split(key, 3)
    x = jax.random.normal(kx, (B, Lq, N_HID), jnp.float32)
    y = jax.random.normal(ky, (B, Lk, N_HID), jnp.float32)

    # Key-padding mask (B, 1, Lk): batch 0 attends to all 16 keys,
    # batch 1 only to the first 11.  Broadcast happens inside the kernel.
    valid = jnp.array([Lk, 11], jnp.int32)
    mask = (jnp.arange(Lk)[None, None, :] < valid[:, None, None]).astype(jnp.float32)

    params = make_params(kp, N_HID)
    packed = pack_params(params)   # one-time packing, outside the call path

    out = cross_mha_forward(x, y, mask, packed, N_HEAD)
    out = jax.block_until_ready(out)

    ref = cross_mha_reference(x, y, mask, params, N_HEAD)
    assert out.shape == (B, Lq, N_HID)
    assert bool(jnp.allclose(out, ref, atol=1e-4, rtol=1e-4))
    print("KERNEL_OK")
</pallas_src>

<mosaic_0001>
module attributes {stable_mosaic.version = 11 : i64} {
  func.func @cross_mha_kernel(%arg0: i32, %arg1: memref<1x8x128xf32, #tpu.memory_space<vmem>>, %arg2: memref<1x16x128xf32, #tpu.memory_space<vmem>>, %arg3: memref<1x1x16xf32, #tpu.memory_space<vmem>>, %arg4: memref<128x128xf32, #tpu.memory_space<vmem>>, %arg5: memref<1x128xf32, #tpu.memory_space<vmem>>, %arg6: memref<256x128xf32, #tpu.memory_space<vmem>>, %arg7: memref<1x256xf32, #tpu.memory_space<vmem>>, %arg8: memref<128x128xf32, #tpu.memory_space<vmem>>, %arg9: memref<1x128xf32, #tpu.memory_space<vmem>>, %arg10: memref<1x8x128xf32, #tpu.memory_space<vmem>>) attributes {dimension_semantics = [#tpu.dimension_semantics<parallel>], iteration_bounds = array<i64: 2>, scalar_prefetch = 0 : i64, scratch_operands = 0 : i64, tpu.core_type = #tpu.core_type<tc>, window_params = [{transform_indices = @transform_0, window_bounds = array<i64: 1, 8, 128>}, {transform_indices = @transform_1, window_bounds = array<i64: 1, 16, 128>}, {transform_indices = @transform_2, window_bounds = array<i64: 1, 1, 16>}, {pipeline_mode = #tpu.pipeline_mode<synchronous>, transform_indices = @transform_3, window_bounds = array<i64: 128, 128>}, {pipeline_mode = #tpu.pipeline_mode<synchronous>, transform_indices = @transform_4, window_bounds = array<i64: 1, 128>}, {pipeline_mode = #tpu.pipeline_mode<synchronous>, transform_indices = @transform_5, window_bounds = array<i64: 256, 128>}, {pipeline_mode = #tpu.pipeline_mode<synchronous>, transform_indices = @transform_6, window_bounds = array<i64: 1, 256>}, {pipeline_mode = #tpu.pipeline_mode<synchronous>, transform_indices = @transform_7, window_bounds = array<i64: 128, 128>}, {pipeline_mode = #tpu.pipeline_mode<synchronous>, transform_indices = @transform_8, window_bounds = array<i64: 1, 128>}, {transform_indices = @transform_9, window_bounds = array<i64: 1, 8, 128>}]} {
    %c0 = arith.constant 0 : index
    %c0_0 = arith.constant 0 : index
    %c0_1 = arith.constant 0 : index
    %0 = vector.load %arg1[%c0, %c0_0, %c0_1] : memref<1x8x128xf32, #tpu.memory_space<vmem>>, vector<1x8x128xf32>
    %1 = vector.shape_cast %0 : vector<1x8x128xf32> to vector<8x128xf32>
    %c0_2 = arith.constant 0 : index
    %c0_3 = arith.constant 0 : index
    %c0_4 = arith.constant 0 : index
    %2 = vector.load %arg2[%c0_2, %c0_3, %c0_4] : memref<1x16x128xf32, #tpu.memory_space<vmem>>, vector<1x16x128xf32>
    %3 = vector.shape_cast %2 : vector<1x16x128xf32> to vector<16x128xf32>
    %c0_5 = arith.constant 0 : index
    %c0_6 = arith.constant 0 : index
    %c0_7 = arith.constant 0 : index
    %4 = vector.load %arg3[%c0_5, %c0_6, %c0_7] : memref<1x1x16xf32, #tpu.memory_space<vmem>>, vector<1x1x16xf32>
    %5 = vector.shape_cast %4 : vector<1x1x16xf32> to vector<1x16xf32>
    %c0_8 = arith.constant 0 : index
    %c0_9 = arith.constant 0 : index
    %6 = vector.load %arg4[%c0_8, %c0_9] : memref<128x128xf32, #tpu.memory_space<vmem>>, vector<128x128xf32>
    %cst = arith.constant dense<0.000000e+00> : vector<8x128xf32>
    %7 = tpu.matmul %1, %6, %cst {dimension_numbers = #tpu.dot_dimension_numbers<[1], [1], [0], [0], [0, 0, 1, 0], [], []>} : vector<8x128xf32>, vector<128x128xf32>, vector<8x128xf32> -> vector<8x128xf32>
    %c0_10 = arith.constant 0 : index
    %c0_11 = arith.constant 0 : index
    %8 = vector.load %arg5[%c0_10, %c0_11] : memref<1x128xf32, #tpu.memory_space<vmem>>, vector<1x128xf32>
    %9 = vector.broadcast %8 : vector<1x128xf32> to vector<8x128xf32>
    %10 = arith.addf %7, %9 : vector<8x128xf32>
    %c0_12 = arith.constant 0 : index
    %c0_13 = arith.constant 0 : index
    %11 = vector.load %arg6[%c0_12, %c0_13] : memref<256x128xf32, #tpu.memory_space<vmem>>, vector<256x128xf32>
    %cst_14 = arith.constant dense<0.000000e+00> : vector<16x256xf32>
    %12 = tpu.matmul %3, %11, %cst_14 {dimension_numbers = #tpu.dot_dimension_numbers<[1], [1], [0], [0], [0, 0, 1, 0], [], []>} : vector<16x128xf32>, vector<256x128xf32>, vector<16x256xf32> -> vector<16x256xf32>
    %c0_15 = arith.constant 0 : index
    %c0_16 = arith.constant 0 : index
    %13 = vector.load %arg7[%c0_15, %c0_16] : memref<1x256xf32, #tpu.memory_space<vmem>>, vector<1x256xf32>
    %14 = vector.broadcast %13 : vector<1x256xf32> to vector<16x256xf32>
    %15 = arith.addf %12, %14 : vector<16x256xf32>
    %16 = vector.extract_strided_slice %15 {offsets = [0, 0], sizes = [16, 128], strides = [1, 1]} : vector<16x256xf32> to vector<16x128xf32>
    %17 = vector.extract_strided_slice %15 {offsets = [0, 128], sizes = [16, 128], strides = [1, 1]} : vector<16x256xf32> to vector<16x128xf32>
    %18 = vector.extract_strided_slice %10 {offsets = [0, 0], sizes = [8, 32], strides = [1, 1]} : vector<8x128xf32> to vector<8x32xf32>
    %19 = vector.extract_strided_slice %16 {offsets = [0, 0], sizes = [16, 32], strides = [1, 1]} : vector<16x128xf32> to vector<16x32xf32>
    %20 = vector.extract_strided_slice %17 {offsets = [0, 0], sizes = [16, 32], strides = [1, 1]} : vector<16x128xf32> to vector<16x32xf32>
    %cst_17 = arith.constant dense<0.000000e+00> : vector<8x16xf32>
    %21 = tpu.matmul %18, %19, %cst_17 {dimension_numbers = #tpu.dot_dimension_numbers<[1], [1], [0], [0], [0, 0, 1, 0], [], []>} : vector<8x32xf32>, vector<16x32xf32>, vector<8x16xf32> -> vector<8x16xf32>
    %cst_18 = arith.constant 0.176776692 : f32
    %22 = vector.broadcast %cst_18 : f32 to vector<8x16xf32>
    %23 = arith.mulf %21, %22 : vector<8x16xf32>
    %cst_19 = arith.constant 0.000000e+00 : f32
    %24 = vector.broadcast %cst_19 : f32 to vector<1x16xf32>
    %25 = arith.cmpf oeq, %5, %24 : vector<1x16xf32>
    %cst_20 = arith.constant -1.000000e+09 : f32
    %26 = vector.shape_cast %25 : vector<1x16xi1> to vector<1x16xi1>
    %27 = vector.broadcast %26 : vector<1x16xi1> to vector<8x16xi1>
    %28 = vector.broadcast %cst_20 : f32 to vector<8x16xf32>
    %29 = arith.select %27, %28, %23 : vector<8x16xi1>, vector<8x16xf32>
    %cst_21 = arith.constant dense<0xFF800000> : vector<8xf32>
    %30 = vector.multi_reduction <maximumf>, %29, %cst_21 [1] : vector<8x16xf32> to vector<8xf32>
    %31 = vector.shape_cast %30 : vector<8xf32> to vector<8x1xf32>
    %32 = vector.broadcast %31 : vector<8x1xf32> to vector<8x16xf32>
    %33 = arith.subf %29, %32 : vector<8x16xf32>
    %34 = math.exp %33 : vector<8x16xf32>
    %cst_22 = arith.constant dense<0.000000e+00> : vector<8xf32>
    %35 = vector.multi_reduction <add>, %34, %cst_22 [1] : vector<8x16xf32> to vector<8xf32>
    %36 = vector.shape_cast %35 : vector<8xf32> to vector<8x1xf32>
    %cst_23 = arith.constant dense<0.000000e+00> : vector<8x32xf32>
    %37 = tpu.matmul %34, %20, %cst_23 {dimension_numbers = #tpu.dot_dimension_numbers<[1], [0], [0], [1], [0, 0, 1, 1], [], []>} : vector<8x16xf32>, vector<16x32xf32>, vector<8x32xf32> -> vector<8x32xf32>
    %38 = tpu.reciprocal %36 : vector<8x1xf32> -> vector<8x1xf32>
    %39 = vector.broadcast %38 : vector<8x1xf32> to vector<8x32xf32>
    %40 = arith.mulf %37, %39 : vector<8x32xf32>
    %41 = vector.extract_strided_slice %10 {offsets = [0, 32], sizes = [8, 32], strides = [1, 1]} : vector<8x128xf32> to vector<8x32xf32>
    %42 = vector.extract_strided_slice %16 {offsets = [0, 32], sizes = [16, 32], strides = [1, 1]} : vector<16x128xf32> to vector<16x32xf32>
    %43 = vector.extract_strided_slice %17 {offsets = [0, 32], sizes = [16, 32], strides = [1, 1]} : vector<16x128xf32> to vector<16x32xf32>
    %cst_24 = arith.constant dense<0.000000e+00> : vector<8x16xf32>
    %44 = tpu.matmul %41, %42, %cst_24 {dimension_numbers = #tpu.dot_dimension_numbers<[1], [1], [0], [0], [0, 0, 1, 0], [], []>} : vector<8x32xf32>, vector<16x32xf32>, vector<8x16xf32> -> vector<8x16xf32>
    %cst_25 = arith.constant 0.176776692 : f32
    %45 = vector.broadcast %cst_25 : f32 to vector<8x16xf32>
    %46 = arith.mulf %44, %45 : vector<8x16xf32>
    %cst_26 = arith.constant 0.000000e+00 : f32
    %47 = vector.broadcast %cst_26 : f32 to vector<1x16xf32>
    %48 = arith.cmpf oeq, %5, %47 : vector<1x16xf32>
    %cst_27 = arith.constant -1.000000e+09 : f32
    %49 = vector.shape_cast %48 : vector<1x16xi1> to vector<1x16xi1>
    %50 = vector.broadcast %49 : vector<1x16xi1> to vector<8x16xi1>
    %51 = vector.broadcast %cst_27 : f32 to vector<8x16xf32>
    %52 = arith.select %50, %51, %46 : vector<8x16xi1>, vector<8x16xf32>
    %cst_28 = arith.constant dense<0xFF800000> : vector<8xf32>
    %53 = vector.multi_reduction <maximumf>, %52, %cst_28 [1] : vector<8x16xf32> to vector<8xf32>
    %54 = vector.shape_cast %53 : vector<8xf32> to vector<8x1xf32>
    %55 = vector.broadcast %54 : vector<8x1xf32> to vector<8x16xf32>
    %56 = arith.subf %52, %55 : vector<8x16xf32>
    %57 = math.exp %56 : vector<8x16xf32>
    %cst_29 = arith.constant dense<0.000000e+00> : vector<8xf32>
    %58 = vector.multi_reduction <add>, %57, %cst_29 [1] : vector<8x16xf32> to vector<8xf32>
    %59 = vector.shape_cast %58 : vector<8xf32> to vector<8x1xf32>
    %cst_30 = arith.constant dense<0.000000e+00> : vector<8x32xf32>
    %60 = tpu.matmul %57, %43, %cst_30 {dimension_numbers = #tpu.dot_dimension_numbers<[1], [0], [0], [1], [0, 0, 1, 1], [], []>} : vector<8x16xf32>, vector<16x32xf32>, vector<8x32xf32> -> vector<8x32xf32>
    %61 = tpu.reciprocal %59 : vector<8x1xf32> -> vector<8x1xf32>
    %62 = vector.broadcast %61 : vector<8x1xf32> to vector<8x32xf32>
    %63 = arith.mulf %60, %62 : vector<8x32xf32>
    %64 = vector.extract_strided_slice %10 {offsets = [0, 64], sizes = [8, 32], strides = [1, 1]} : vector<8x128xf32> to vector<8x32xf32>
    %65 = vector.extract_strided_slice %16 {offsets = [0, 64], sizes = [16, 32], strides = [1, 1]} : vector<16x128xf32> to vector<16x32xf32>
    %66 = vector.extract_strided_slice %17 {offsets = [0, 64], sizes = [16, 32], strides = [1, 1]} : vector<16x128xf32> to vector<16x32xf32>
    %cst_31 = arith.constant dense<0.000000e+00> : vector<8x16xf32>
    %67 = tpu.matmul %64, %65, %cst_31 {dimension_numbers = #tpu.dot_dimension_numbers<[1], [1], [0], [0], [0, 0, 1, 0], [], []>} : vector<8x32xf32>, vector<16x32xf32>, vector<8x16xf32> -> vector<8x16xf32>
    %cst_32 = arith.constant 0.176776692 : f32
    %68 = vector.broadcast %cst_32 : f32 to vector<8x16xf32>
    %69 = arith.mulf %67, %68 : vector<8x16xf32>
    %cst_33 = arith.constant 0.000000e+00 : f32
    %70 = vector.broadcast %cst_33 : f32 to vector<1x16xf32>
    %71 = arith.cmpf oeq, %5, %70 : vector<1x16xf32>
    %cst_34 = arith.constant -1.000000e+09 : f32
    %72 = vector.shape_cast %71 : vector<1x16xi1> to vector<1x16xi1>
    %73 = vector.broadcast %72 : vector<1x16xi1> to vector<8x16xi1>
    %74 = vector.broadcast %cst_34 : f32 to vector<8x16xf32>
    %75 = arith.select %73, %74, %69 : vector<8x16xi1>, vector<8x16xf32>
    %cst_35 = arith.constant dense<0xFF800000> : vector<8xf32>
    %76 = vector.multi_reduction <maximumf>, %75, %cst_35 [1] : vector<8x16xf32> to vector<8xf32>
    %77 = vector.shape_cast %76 : vector<8xf32> to vector<8x1xf32>
    %78 = vector.broadcast %77 : vector<8x1xf32> to vector<8x16xf32>
    %79 = arith.subf %75, %78 : vector<8x16xf32>
    %80 = math.exp %79 : vector<8x16xf32>
    %cst_36 = arith.constant dense<0.000000e+00> : vector<8xf32>
    %81 = vector.multi_reduction <add>, %80, %cst_36 [1] : vector<8x16xf32> to vector<8xf32>
    %82 = vector.shape_cast %81 : vector<8xf32> to vector<8x1xf32>
    %cst_37 = arith.constant dense<0.000000e+00> : vector<8x32xf32>
    %83 = tpu.matmul %80, %66, %cst_37 {dimension_numbers = #tpu.dot_dimension_numbers<[1], [0], [0], [1], [0, 0, 1, 1], [], []>} : vector<8x16xf32>, vector<16x32xf32>, vector<8x32xf32> -> vector<8x32xf32>
    %84 = tpu.reciprocal %82 : vector<8x1xf32> -> vector<8x1xf32>
    %85 = vector.broadcast %84 : vector<8x1xf32> to vector<8x32xf32>
    %86 = arith.mulf %83, %85 : vector<8x32xf32>
    %87 = vector.extract_strided_slice %10 {offsets = [0, 96], sizes = [8, 32], strides = [1, 1]} : vector<8x128xf32> to vector<8x32xf32>
    %88 = vector.extract_strided_slice %16 {offsets = [0, 96], sizes = [16, 32], strides = [1, 1]} : vector<16x128xf32> to vector<16x32xf32>
    %89 = vector.extract_strided_slice %17 {offsets = [0, 96], sizes = [16, 32], strides = [1, 1]} : vector<16x128xf32> to vector<16x32xf32>
    %cst_38 = arith.constant dense<0.000000e+00> : vector<8x16xf32>
    %90 = tpu.matmul %87, %88, %cst_38 {dimension_numbers = #tpu.dot_dimension_numbers<[1], [1], [0], [0], [0, 0, 1, 0], [], []>} : vector<8x32xf32>, vector<16x32xf32>, vector<8x16xf32> -> vector<8x16xf32>
    %cst_39 = arith.constant 0.176776692 : f32
    %91 = vector.broadcast %cst_39 : f32 to vector<8x16xf32>
    %92 = arith.mulf %90, %91 : vector<8x16xf32>
    %cst_40 = arith.constant 0.000000e+00 : f32
    %93 = vector.broadcast %cst_40 : f32 to vector<1x16xf32>
    %94 = arith.cmpf oeq, %5, %93 : vector<1x16xf32>
    %cst_41 = arith.constant -1.000000e+09 : f32
    %95 = vector.shape_cast %94 : vector<1x16xi1> to vector<1x16xi1>
    %96 = vector.broadcast %95 : vector<1x16xi1> to vector<8x16xi1>
    %97 = vector.broadcast %cst_41 : f32 to vector<8x16xf32>
    %98 = arith.select %96, %97, %92 : vector<8x16xi1>, vector<8x16xf32>
    %cst_42 = arith.constant dense<0xFF800000> : vector<8xf32>
    %99 = vector.multi_reduction <maximumf>, %98, %cst_42 [1] : vector<8x16xf32> to vector<8xf32>
    %100 = vector.shape_cast %99 : vector<8xf32> to vector<8x1xf32>
    %101 = vector.broadcast %100 : vector<8x1xf32> to vector<8x16xf32>
    %102 = arith.subf %98, %101 : vector<8x16xf32>
    %103 = math.exp %102 : vector<8x16xf32>
    %cst_43 = arith.constant dense<0.000000e+00> : vector<8xf32>
    %104 = vector.multi_reduction <add>, %103, %cst_43 [1] : vector<8x16xf32> to vector<8xf32>
    %105 = vector.shape_cast %104 : vector<8xf32> to vector<8x1xf32>
    %cst_44 = arith.constant dense<0.000000e+00> : vector<8x32xf32>
    %106 = tpu.matmul %103, %89, %cst_44 {dimension_numbers = #tpu.dot_dimension_numbers<[1], [0], [0], [1], [0, 0, 1, 1], [], []>} : vector<8x16xf32>, vector<16x32xf32>, vector<8x32xf32> -> vector<8x32xf32>
    %107 = tpu.reciprocal %105 : vector<8x1xf32> -> vector<8x1xf32>
    %108 = vector.broadcast %107 : vector<8x1xf32> to vector<8x32xf32>
    %109 = arith.mulf %106, %108 : vector<8x32xf32>
    %110 = tpu.concatenate %40, %63, %86, %109 in 1 : vector<8x32xf32>, vector<8x32xf32>, vector<8x32xf32>, vector<8x32xf32> -> vector<8x128xf32>
    %c0_45 = arith.constant 0 : index
    %c0_46 = arith.constant 0 : index
    %111 = vector.load %arg8[%c0_45, %c0_46] : memref<128x128xf32, #tpu.memory_space<vmem>>, vector<128x128xf32>
    %cst_47 = arith.constant dense<0.000000e+00> : vector<8x128xf32>
    %112 = tpu.matmul %110, %111, %cst_47 {dimension_numbers = #tpu.dot_dimension_numbers<[1], [1], [0], [0], [0, 0, 1, 0], [], []>} : vector<8x128xf32>, vector<128x128xf32>, vector<8x128xf32> -> vector<8x128xf32>
    %c0_48 = arith.constant 0 : index
    %c0_49 = arith.constant 0 : index
    %113 = vector.load %arg9[%c0_48, %c0_49] : memref<1x128xf32, #tpu.memory_space<vmem>>, vector<1x128xf32>
    %114 = vector.broadcast %113 : vector<1x128xf32> to vector<8x128xf32>
    %115 = arith.addf %112, %114 : vector<8x128xf32>
    %c0_50 = arith.constant 0 : index
    %c0_51 = arith.constant 0 : index
    %c0_52 = arith.constant 0 : index
    %116 = vector.load %arg10[%c0_50, %c0_51, %c0_52] : memref<1x8x128xf32, #tpu.memory_space<vmem>>, vector<1x8x128xf32>
    %117 = vector.shape_cast %116 : vector<1x8x128xf32> to vector<8x128xf32>
    %118 = vector.shape_cast %115 : vector<8x128xf32> to vector<1x8x128xf32>
    tpu.vector_store %arg10[%c0_50, %c0_51, %c0_52], %118 {strides = array<i32>} : memref<1x8x128xf32, #tpu.memory_space<vmem>>, vector<1x8x128xf32>,
    return
  }
  func.func @transform_0(%arg0: i32) -> (i32, i32, i32) {
    %c0_i32 = arith.constant 0 : i32
    %c0_i32_0 = arith.constant 0 : i32
    %c0_i32_1 = arith.constant 0 : i32
    return %arg0, %c0_i32, %c0_i32_0 : i32, i32, i32
  }
  func.func @transform_1(%arg0: i32) -> (i32, i32, i32) {
    %c0_i32 = arith.constant 0 : i32
    %c0_i32_0 = arith.constant 0 : i32
    %c0_i32_1 = arith.constant 0 : i32
    return %arg0, %c0_i32, %c0_i32_0 : i32, i32, i32
  }
  func.func @transform_2(%arg0: i32) -> (i32, i32, i32) {
    %c0_i32 = arith.constant 0 : i32
    %c0_i32_0 = arith.constant 0 : i32
    %c0_i32_1 = arith.constant 0 : i32
    return %arg0, %c0_i32, %c0_i32_0 : i32, i32, i32
  }
  func.func @transform_3(%arg0: i32) -> (i32, i32) {
    %c0_i32 = arith.constant 0 : i32
    %c0_i32_0 = arith.constant 0 : i32
    %c0_i32_1 = arith.constant 0 : i32
    return %c0_i32, %c0_i32_0 : i32, i32
  }
  func.func @transform_4(%arg0: i32) -> (i32, i32) {
    %c0_i32 = arith.constant 0 : i32
    %c0_i32_0 = arith.constant 0 : i32
    %c0_i32_1 = arith.constant 0 : i32
    return %c0_i32, %c0_i32_0 : i32, i32
  }
  func.func @transform_5(%arg0: i32) -> (i32, i32) {
    %c0_i32 = arith.constant 0 : i32
    %c0_i32_0 = arith.constant 0 : i32
    %c0_i32_1 = arith.constant 0 : i32
    return %c0_i32, %c0_i32_0 : i32, i32
  }
  func.func @transform_6(%arg0: i32) -> (i32, i32) {
    %c0_i32 = arith.constant 0 : i32
    %c0_i32_0 = arith.constant 0 : i32
    %c0_i32_1 = arith.constant 0 : i32
    return %c0_i32, %c0_i32_0 : i32, i32
  }
  func.func @transform_7(%arg0: i32) -> (i32, i32) {
    %c0_i32 = arith.constant 0 : i32
    %c0_i32_0 = arith.constant 0 : i32
    %c0_i32_1 = arith.constant 0 : i32
    return %c0_i32, %c0_i32_0 : i32, i32
  }
  func.func @transform_8(%arg0: i32) -> (i32, i32) {
    %c0_i32 = arith.constant 0 : i32
    %c0_i32_0 = arith.constant 0 : i32
    %c0_i32_1 = arith.constant 0 : i32
    return %c0_i32, %c0_i32_0 : i32, i32
  }
  func.func @transform_9(%arg0: i32) -> (i32, i32, i32) {
    %c0_i32 = arith.constant 0 : i32
    %c0_i32_0 = arith.constant 0 : i32
    %c0_i32_1 = arith.constant 0 : i32
    return %arg0, %c0_i32, %c0_i32_0 : i32, i32, i32
  }
}

</mosaic_0001>

<llo_original>
// kernel: tpu_custom_call.1
$region0: #{tpu_custom_call.1}
  #allocation0 [shape = 'u32[]', space=smem, size = 0x4, offset = 0x4, fixed_abs, tag = 'smem constant byte address 0x4 - core index']
  #allocation1 [shape = 'u32[144,128]{1,0:T(1,128)}', space=vmem, size = 0x12000, scoped, tag = 'internal scratch']
  %s0 = inlined_call_operand.hbm [shape: f32[2,8,128], index: 0, kind: input, shape index: {}]
  %s1 = inlined_call_operand.hbm [shape: f32[2,16,128], index: 1, kind: input, shape index: {}]
  %s2 = inlined_call_operand.vmem [shape: f32[2,1,16], index: 2, kind: input, shape index: {}]
  %s3 = inlined_call_operand.hbm [shape: f32[128,128], index: 3, kind: input, shape index: {}]
  %s4 = inlined_call_operand.vmem [shape: f32[1,128], index: 4, kind: input, shape index: {}]
  %s5 = inlined_call_operand.hbm [shape: f32[256,128], index: 5, kind: input, shape index: {}]
  %s6 = inlined_call_operand.vmem [shape: f32[1,256], index: 6, kind: input, shape index: {}]
  %s7 = inlined_call_operand.hbm [shape: f32[128,128], index: 7, kind: input, shape index: {}]
  %s8 = inlined_call_operand.vmem [shape: f32[1,128], index: 8, kind: input, shape index: {}]
  %s9 = inlined_call_operand.hbm [shape: f32[2,8,128], index: 9, kind: output, shape index: {}]
  %s10 = sld [smem:[#allocation0]]
  $region89: #{tpu_custom_call.1} parent=0
    _
  %s12 = ssub.s32 1, %s10
  %s13 = scalar_select 0, %s12, %s10
  $region1: #{tpu_custom_call.1} parent=0
    #allocation2 [shape = 'u8[8192]{0}', space=vmem, size = 0x2000, scoped, tag = 'input window, operand 0']
    #allocation3 [shape = 's32[2]{0}', space=sflag, size = 0x8, scoped, tag = 'scoped memory for tpu_custom_call.1']
    #allocation4 [shape = 's32[2]{0}', space=sflag, size = 0x8, scoped, tag = 'scoped memory for tpu_custom_call.1']
    #allocation5 [shape = 'u8[16384]{0}', space=vmem, size = 0x4000, scoped, tag = 'input window, operand 1']
    #allocation6 [shape = 's32[2]{0}', space=sflag, size = 0x8, scoped, tag = 'scoped memory for tpu_custom_call.1']
    #allocation7 [shape = 'u8[65536]{0}', space=vmem, size = 0x10000, scoped, tag = 'input window, operand 3, single buffered']
    #allocation8 [shape = 'u8[131072]{0}', space=vmem, size = 0x20000, scoped, tag = 'input window, operand 5, single buffered']
    #allocation9 [shape = 's32[1]{0}', space=sflag, size = 0x4, scoped, tag = 'scoped memory for tpu_custom_call.1']
    #allocation10 [shape = 'u8[65536]{0}', space=vmem, size = 0x10000, scoped, tag = 'input window, operand 7, single buffered']
    #allocation11 [shape = 'u8[8192]{0}', space=vmem, size = 0x2000, scoped, tag = 'output window, operand 0']
    %14 = vsyncpa [#allocation3], 0
    %s15 = scalar_lea.sflag [#allocation3], 1
    %16 = vsyncpa %s15, 0
    %17 = vsyncpa [#allocation6], 0
    %s18 = scalar_lea.sflag [#allocation6], 1
    %19 = vsyncpa %s18, 0
    %20 = vsyncpa [#allocation9], 0
    %21 = vsyncpa [#allocation4], 0
    %s22 = scalar_lea.sflag [#allocation4], 1
    %23 = vsyncpa %s22, 0
    loop: start=0, step=1, limit=4
    $region2: #{tpu_custom_call.1} parent=1 // loop_pre_header
      _
    $region3: #{tpu_custom_call.1} parent=1 // loop_header
      %s25 = sphi 0, %s29
      %p26 = scmp.ge.s32.totalorder %s25, 4
      %s35 = sphi 0, %s37
      %s38 = sphi 0, %s35
      %s39 = sphi 0, %s38
      %s55 = sphi 0, %s39
      %s61 = sphi 0, %s63
      %s64 = sphi 0, %s61
      %s65 = sphi 0, %s64
      %s81 = sphi 0, %s65
      %s87 = sphi 0, %s89
      %s90 = sphi 0, %s87
      %s91 = sphi 0, %s90
      %s107 = sphi 0, %s91
      %s111 = sphi 0, %s111
      %s113 = sphi 0, %s111
      %s114 = sphi 0, %s113
      %s128 = sphi 0, %s114
      %s132 = sphi 0, %s132
      %s134 = sphi 0, %s132
      %s135 = sphi 0, %s134
      %s149 = sphi 0, %s135
      %s153 = sphi 0, %s153
      %s155 = sphi 0, %s153
      %s156 = sphi 0, %s155
      %s170 = sphi 0, %s156
      %s174 = sphi 0, %s174
      %s176 = sphi 0, %s174
      %s177 = sphi 0, %s176
      %s191 = sphi 0, %s177
      %s195 = sphi 0, %s195
      %s197 = sphi 0, %s195
      %s198 = sphi 0, %s197
      %s212 = sphi 0, %s198
      %s216 = sphi 0, %s216
      %s218 = sphi 0, %s216
      %s219 = sphi 0, %s218
      %s233 = sphi 0, %s219
      %s239 = sphi 0, %s241
      %s242 = sphi 0, %s239
      %s243 = sphi 0, %s242
      %s259 = sphi 0, %s243
    $region4: #{tpu_custom_call.1} parent=1 // loop_header_branch
      %28 = sbr.rel (%p26) target = $region8
    $region5: #{tpu_custom_call.1} parent=1 // loop_body
      %s30 = ssub.s32 %s25, 1
      %s31 = ssub.s32 %s25, 2
      %s32 = sadd.s32 %s25, 1
      %s33 = ssub.s32 %s25, %s32
      %p34 = scmp.eq.s32.totalorder %s33, 0
      %s36 = sadd.s32 %s35, 1
      %s37 = scalar_select %p34, %s35, %s36
      %p40 = pneg %p34
      %p41 = scmp.eq.s32.totalorder %s25, 1
      %p42 = por %p40, %p41
      %p43 = scmp.ne.s32.totalorder %s35, %s38
      %p44 = scmp.eq.s32.totalorder %s25, 0
      %p45 = por %p43, %p44
      %p46 = scmp.ne.s32.totalorder %s35, %s38
      %p47 = scmp.eq.s32.totalorder %s30, 1
      %p48 = por %p46, %p47
      %p49 = scmp.ne.s32.totalorder %s38, %s39
      %p50 = scmp.eq.s32.totalorder %s30, 0
      %p51 = por %p49, %p50
      %p52 = scmp.ne.s32.totalorder %s38, %s39
      %p53 = scmp.eq.s32.totalorder %s31, 1
      %p54 = por %p52, %p53
      %p56 = scmp.ne.s32.totalorder %s39, %s55
      %p57 = scmp.eq.s32.totalorder %s31, 0
      %p58 = por %p56, %p57
      %s59 = ssub.s32 %s25, %s32
      %p60 = scmp.eq.s32.totalorder %s59, 0
      %s62 = sadd.s32 %s61, 1
      %s63 = scalar_select %p60, %s61, %s62
      %p66 = pneg %p60
      %p67 = scmp.eq.s32.totalorder %s25, 1
      %p68 = por %p66, %p67
      %p69 = scmp.ne.s32.totalorder %s61, %s64
      %p70 = scmp.eq.s32.totalorder %s25, 0
      %p71 = por %p69, %p70
      %p72 = scmp.ne.s32.totalorder %s61, %s64
      %p73 = scmp.eq.s32.totalorder %s30, 1
      %p74 = por %p72, %p73
      %p75 = scmp.ne.s32.totalorder %s64, %s65
      %p76 = scmp.eq.s32.totalorder %s30, 0
      %p77 = por %p75, %p76
      %p78 = scmp.ne.s32.totalorder %s64, %s65
      %p79 = scmp.eq.s32.totalorder %s31, 1
      %p80 = por %p78, %p79
      %p82 = scmp.ne.s32.totalorder %s65, %s81
      %p83 = scmp.eq.s32.totalorder %s31, 0
      %p84 = por %p82, %p83
      %s85 = ssub.s32 %s25, %s32
      %p86 = scmp.eq.s32.totalorder %s85, 0
      %s88 = sadd.s32 %s87, 1
      %s89 = scalar_select %p86, %s87, %s88
      %p92 = pneg %p86
      %p93 = scmp.eq.s32.totalorder %s25, 1
      %p94 = por %p92, %p93
      %p95 = scmp.ne.s32.totalorder %s87, %s90
      %p96 = scmp.eq.s32.totalorder %s25, 0
      %p97 = por %p95, %p96
      %p98 = scmp.ne.s32.totalorder %s87, %s90
      %p99 = scmp.eq.s32.totalorder %s30, 1
      %p100 = por %p98, %p99
      %p101 = scmp.ne.s32.totalorder %s90, %s91
      %p102 = scmp.eq.s32.totalorder %s30, 0
      %p103 = por %p101, %p102
      %p104 = scmp.ne.s32.totalorder %s90, %s91
      %p105 = scmp.eq.s32.totalorder %s31, 1
      %p106 = por %p104, %p105
      %p108 = scmp.ne.s32.totalorder %s91, %s107
      %p109 = scmp.eq.s32.totalorder %s31, 0
      %p110 = por %p108, %p109
      %s112 = sadd.s32 %s111, 1
      %p115 = scmp.eq.s32.totalorder %s25, 1
      %p116 = scmp.ne.s32.totalorder %s111, %s113
      %p117 = scmp.eq.s32.totalorder %s25, 0
      %p118 = por %p116, %p117
      %p119 = scmp.ne.s32.totalorder %s111, %s113
      %p120 = scmp.eq.s32.totalorder %s30, 1
      %p121 = por %p119, %p120
      %p122 = scmp.ne.s32.totalorder %s113, %s114
      %p123 = scmp.eq.s32.totalorder %s30, 0
      %p124 = por %p122, %p123
      %p125 = scmp.ne.s32.totalorder %s113, %s114
      %p126 = scmp.eq.s32.totalorder %s31, 1
      %p127 = por %p125, %p126
      %p129 = scmp.ne.s32.totalorder %s114, %s128
      %p130 = scmp.eq.s32.totalorder %s31, 0
      %p131 = por %p129, %p130
      %s133 = sadd.s32 %s132, 1
      %p136 = scmp.eq.s32.totalorder %s25, 1
      %p137 = scmp.ne.s32.totalorder %s132, %s134
      %p138 = scmp.eq.s32.totalorder %s25, 0
      %p139 = por %p137, %p138
      %p140 = scmp.ne.s32.totalorder %s132, %s134
      %p141 = scmp.eq.s32.totalorder %s30, 1
      %p142 = por %p140, %p141
      %p143 = scmp.ne.s32.totalorder %s134, %s135
      %p144 = scmp.eq.s32.totalorder %s30, 0
      %p145 = por %p143, %p144
      %p146 = scmp.ne.s32.totalorder %s134, %s135
      %p147 = scmp.eq.s32.totalorder %s31, 1
      %p148 = por %p146, %p147
      %p150 = scmp.ne.s32.totalorder %s135, %s149
      %p151 = scmp.eq.s32.totalorder %s31, 0
      %p152 = por %p150, %p151
      %s154 = sadd.s32 %s153, 1
      %p157 = scmp.eq.s32.totalorder %s25, 1
      %p158 = scmp.ne.s32.totalorder %s153, %s155
      %p159 = scmp.eq.s32.totalorder %s25, 0
      %p160 = por %p158, %p159
      %p161 = scmp.ne.s32.totalorder %s153, %s155
      %p162 = scmp.eq.s32.totalorder %s30, 1
      %p163 = por %p161, %p162
      %p164 = scmp.ne.s32.totalorder %s155, %s156
      %p165 = scmp.eq.s32.totalorder %s30, 0
      %p166 = por %p164, %p165
      %p167 = scmp.ne.s32.totalorder %s155, %s156
      %p168 = scmp.eq.s32.totalorder %s31, 1
      %p169 = por %p167, %p168
      %p171 = scmp.ne.s32.totalorder %s156, %s170
      %p172 = scmp.eq.s32.totalorder %s31, 0
      %p173 = por %p171, %p172
      %s175 = sadd.s32 %s174, 1
      %p178 = scmp.eq.s32.totalorder %s25, 1
      %p179 = scmp.ne.s32.totalorder %s174, %s176
      %p180 = scmp.eq.s32.totalorder %s25, 0
      %p181 = por %p179, %p180
      %p182 = scmp.ne.s32.totalorder %s174, %s176
      %p183 = scmp.eq.s32.totalorder %s30, 1
      %p184 = por %p182, %p183
      %p185 = scmp.ne.s32.totalorder %s176, %s177
      %p186 = scmp.eq.s32.totalorder %s30, 0
      %p187 = por %p185, %p186
      %p188 = scmp.ne.s32.totalorder %s176, %s177
      %p189 = scmp.eq.s32.totalorder %s31, 1
      %p190 = por %p188, %p189
      %p192 = scmp.ne.s32.totalorder %s177, %s191
      %p193 = scmp.eq.s32.totalorder %s31, 0
      %p194 = por %p192, %p193
      %s196 = sadd.s32 %s195, 1
      %p199 = scmp.eq.s32.totalorder %s25, 1
      %p200 = scmp.ne.s32.totalorder %s195, %s197
      %p201 = scmp.eq.s32.totalorder %s25, 0
      %p202 = por %p200, %p201
      %p203 = scmp.ne.s32.totalorder %s195, %s197
      %p204 = scmp.eq.s32.totalorder %s30, 1
      %p205 = por %p203, %p204
      %p206 = scmp.ne.s32.totalorder %s197, %s198
      %p207 = scmp.eq.s32.totalorder %s30, 0
      %p208 = por %p206, %p207
      %p209 = scmp.ne.s32.totalorder %s197, %s198
      %p210 = scmp.eq.s32.totalorder %s31, 1
      %p211 = por %p209, %p210
      %p213 = scmp.ne.s32.totalorder %s198, %s212
      %p214 = scmp.eq.s32.totalorder %s31, 0
      %p215 = por %p213, %p214
      %s217 = sadd.s32 %s216, 1
      %p220 = scmp.eq.s32.totalorder %s25, 1
      %p221 = scmp.ne.s32.totalorder %s216, %s218
      %p222 = scmp.eq.s32.totalorder %s25, 0
      %p223 = por %p221, %p222
      %p224 = scmp.ne.s32.totalorder %s216, %s218
      %p225 = scmp.eq.s32.totalorder %s30, 1
      %p226 = por %p224, %p225
      %p227 = scmp.ne.s32.totalorder %s218, %s219
      %p228 = scmp.eq.s32.totalorder %s30, 0
      %p229 = por %p227, %p228
      %p230 = scmp.ne.s32.totalorder %s218, %s219
      %p231 = scmp.eq.s32.totalorder %s31, 1
      %p232 = por %p230, %p231
      %p234 = scmp.ne.s32.totalorder %s219, %s233
      %p235 = scmp.eq.s32.totalorder %s31, 0
      %p236 = por %p234, %p235
      %s237 = ssub.s32 %s25, %s32
      %p238 = scmp.eq.s32.totalorder %s237, 0
      %s240 = sadd.s32 %s239, 1
      %s241 = scalar_select %p238, %s239, %s240
      %p244 = pneg %p238
      %p245 = scmp.eq.s32.totalorder %s25, 1
      %p246 = por %p244, %p245
      %p247 = scmp.ne.s32.totalorder %s239, %s242
      %p248 = scmp.eq.s32.totalorder %s25, 0
      %p249 = por %p247, %p248
      %p250 = scmp.ne.s32.totalorder %s239, %s242
      %p251 = scmp.eq.s32.totalorder %s30, 1
      %p252 = por %p250, %p251
      %p253 = scmp.ne.s32.totalorder %s242, %s243
      %p254 = scmp.eq.s32.totalorder %s30, 0
      %p255 = por %p253, %p254
      %p256 = scmp.ne.s32.totalorder %s242, %s243
      %p257 = scmp.eq.s32.totalorder %s31, 1
      %p258 = por %p256, %p257
      %p260 = scmp.ne.s32.totalorder %s243, %s259
      %p261 = scmp.eq.s32.totalorder %s31, 0
      %p262 = por %p260, %p261
      %p263 = scmp.le.s32.totalorder 1, %s25
      %p264 = scmp.lt.s32.totalorder %s25, 3
      %p265 = pnand %p263, %p264
      %p266 = pneg %p265
      // Predicated region
      $region9: #{tpu_custom_call.1} parent=5 // pred_check
        _
      $region10: #{tpu_custom_call.1} parent=5 // pred_check_branch
        %268 = sbr.rel (%p265) target = $region12
      $region11: #{tpu_custom_call.1} parent=5 // pred_region
        %s269 = ssub.s32 %s25, 1
        // Predicated region
        $region13: #{tpu_custom_call.1} parent=11 // pred_check
          %p270 = pneg %p124
        $region14: #{tpu_custom_call.1} parent=11 // pred_check_branch
          %272 = sbr.rel (%p270) target = $region16
        $region15: #{tpu_custom_call.1} parent=11 // pred_region
          %s274 = ssub.s32 2048, 2048
          %275 = vsyncadd [#allocation6], %s274
          %s276 = sshll.u32 [#allocation7], 4
          %s277 = int_to_ptr.vmem [resolvable:$true] %s276
          %282 = dma.hbm_to_vmem [thread:$0]  %s3, 2048, %s277, [#allocation6], 128, 128, 8
        $region16: #{tpu_custom_call.1} parent=11 // pred_fallthru
          _
        // Predicated region
        $region17: #{tpu_custom_call.1} parent=11 // pred_check
          %p283 = pneg %p145
        $region18: #{tpu_custom_call.1} parent=11 // pred_check_branch
          %285 = sbr.rel (%p283) target = $region20
        $region19: #{tpu_custom_call.1} parent=11 // pred_region
          _
        $region20: #{tpu_custom_call.1} parent=11 // pred_fallthru
          _
        // Predicated region
        $region21: #{tpu_custom_call.1} parent=11 // pred_check
          %p286 = pneg %p166
        $region22: #{tpu_custom_call.1} parent=11 // pred_check_branch
          %288 = sbr.rel (%p286) target = $region24
        $region23: #{tpu_custom_call.1} parent=11 // pred_region
          %s290 = ssub.s32 4096, 4096
          %291 = vsyncadd [#allocation9], %s290
          %s292 = sshll.u32 [#allocation8], 4
          %s293 = int_to_ptr.vmem [resolvable:$true] %s292
          %298 = dma.hbm_to_vmem [thread:$0]  %s5, 4096, %s293, [#allocation9], 128, 128, 8
        $region24: #{tpu_custom_call.1} parent=11 // pred_fallthru
          _
        // Predicated region
        $region25: #{tpu_custom_call.1} parent=11 // pred_check
          %p299 = pneg %p187
        $region26: #{tpu_custom_call.1} parent=11 // pred_check_branch
          %301 = sbr.rel (%p299) target = $region28
        $region27: #{tpu_custom_call.1} parent=11 // pred_region
          _
        $region28: #{tpu_custom_call.1} parent=11 // pred_fallthru
          _
        // Predicated region
        $region29: #{tpu_custom_call.1} parent=11 // pred_check
          %p302 = pneg %p208
        $region30: #{tpu_custom_call.1} parent=11 // pred_check_branch
          %304 = sbr.rel (%p302) target = $region32
        $region31: #{tpu_custom_call.1} parent=11 // pred_region
          %s306 = ssub.s32 2048, 2048
          %307 = vsyncadd [#allocation9], %s306
          %s308 = sshll.u32 [#allocation10], 4
          %s309 = int_to_ptr.vmem [resolvable:$true] %s308
          %314 = dma.hbm_to_vmem [thread:$0]  %s7, 2048, %s309, [#allocation9], 128, 128, 8
        $region32: #{tpu_custom_call.1} parent=11 // pred_fallthru
          _
        // Predicated region
        $region33: #{tpu_custom_call.1} parent=11 // pred_check
          %p315 = pneg %p229
        $region34: #{tpu_custom_call.1} parent=11 // pred_check_branch
          %317 = sbr.rel (%p315) target = $region36
        $region35: #{tpu_custom_call.1} parent=11 // pred_region
          _
        $region36: #{tpu_custom_call.1} parent=11 // pred_fallthru
          _
      $region12: #{tpu_custom_call.1} parent=5 // pred_fallthru
        _
      %p318 = scmp.lt.s32.totalorder %s25, 2
      // Predicated region
      $region37: #{tpu_custom_call.1} parent=5 // pred_check
        %p319 = pneg %p318
      $region38: #{tpu_custom_call.1} parent=5 // pred_check_branch
        %321 = sbr.rel (%p319) target = $region40
      $region39: #{tpu_custom_call.1} parent=5 // pred_region
        // Predicated region
        $region41: #{tpu_custom_call.1} parent=39 // pred_check
          %p322 = pneg %p45
        $region42: #{tpu_custom_call.1} parent=39 // pred_check_branch
          %324 = sbr.rel (%p322) target = $region44
        $region43: #{tpu_custom_call.1} parent=39 // pred_region
          %s325 = sand.u32 %s35, 1
          %s326 = scalar_lea.sflag [#allocation3], %s325
          %s327 = sand.u32 %s35, 1
          %s328 = smul.addr %s327, 8
          %s329 = scalar_lea.vmem [#allocation2], %s328
          %s331 = ssub.s32 128, 128
          %332 = vsyncadd %s326, %s331
          %s333 = smul.addr %s25, 128
          %s334 = scalar_lea.hbm %s0, %s333
          %s336 = sshll.u32 %s329, 4
          %s337 = int_to_ptr.vmem [resolvable:$true] %s336
          %339 = dma.hbm_to_vmem [thread:$0]  %s334, 128, %s337, %s326
        $region44: #{tpu_custom_call.1} parent=39 // pred_fallthru
          _
        // Predicated region
        $region45: #{tpu_custom_call.1} parent=39 // pred_check
          %p340 = pneg %p71
        $region46: #{tpu_custom_call.1} parent=39 // pred_check_branch
          %342 = sbr.rel (%p340) target = $region48
        $region47: #{tpu_custom_call.1} parent=39 // pred_region
          %s343 = sand.u32 %s25, 1
          %s344 = scalar_lea.sflag [#allocation6], %s343
          %s345 = sand.u32 %s61, 1
          %s346 = smul.addr %s345, 16
          %s347 = scalar_lea.vmem [#allocation5], %s346
          %s349 = ssub.s32 256, 256
          %350 = vsyncadd %s344, %s349
          %s351 = smul.addr %s25, 2
          %s352 = smul.addr %s351, 128
          %s353 = scalar_lea.hbm %s1, %s352
          %s354 = sshll.u32 %s347, 4
          %s355 = int_to_ptr.vmem [resolvable:$true] %s354
          %360 = dma.hbm_to_vmem [thread:$0]  %s353, 256, %s355, %s344, 128, 128, 8
        $region48: #{tpu_custom_call.1} parent=39 // pred_fallthru
          _
        // Predicated region
        $region49: #{tpu_custom_call.1} parent=39 // pred_check
          %p361 = pneg %p97
        $region50: #{tpu_custom_call.1} parent=39 // pred_check_branch
          %363 = sbr.rel (%p361) target = $region52
        $region51: #{tpu_custom_call.1} parent=39 // pred_region
          %p364 = scmp.lt.s32.totalorder %s25, 1
          %s365 = scalar_select %p364, %s25, 1
          %s366 = scalar_lea.vmem %s2, %s365
        $region52: #{tpu_custom_call.1} parent=39 // pred_fallthru
          _
      $region40: #{tpu_custom_call.1} parent=5 // pred_fallthru
        _
      %p367 = scmp.le.s32.totalorder 1, %s25
      %p368 = scmp.lt.s32.totalorder %s25, 3
      %p369 = pnand %p367, %p368
      %p370 = pneg %p369
      // Predicated region
      $region53: #{tpu_custom_call.1} parent=5 // pred_check
        _
      $region54: #{tpu_custom_call.1} parent=5 // pred_check_branch
        %372 = sbr.rel (%p369) target = $region56
      $region55: #{tpu_custom_call.1} parent=5 // pred_region
        %s373 = ssub.s32 %s25, 1
        %s374 = sand.u32 %s38, 1
        %s375 = scalar_lea.sflag [#allocation3], %s374
        %s376 = sand.u32 %s38, 1
        %s377 = smul.addr %s376, 8
        %s378 = scalar_lea.vmem [#allocation2], %s377
        // Predicated region
        $region57: #{tpu_custom_call.1} parent=55 // pred_check
          %p379 = pneg %p51
        $region58: #{tpu_custom_call.1} parent=55 // pred_check_branch
          %381 = sbr.rel (%p379) target = $region60
        $region59: #{tpu_custom_call.1} parent=55 // pred_region
          %382 = dma.done %s375, 128
        $region60: #{tpu_custom_call.1} parent=55 // pred_fallthru
          _
        %s383 = sand.u32 %s30, 1
        %s384 = scalar_lea.sflag [#allocation6], %s383
        %s385 = sand.u32 %s64, 1
        %s386 = smul.addr %s385, 16
        %s387 = scalar_lea.vmem [#allocation5], %s386
        // Predicated region
        $region61: #{tpu_custom_call.1} parent=55 // pred_check
          %p388 = pneg %p77
        $region62: #{tpu_custom_call.1} parent=55 // pred_check_branch
          %390 = sbr.rel (%p388) target = $region64
        $region63: #{tpu_custom_call.1} parent=55 // pred_region
          %391 = dma.done %s384, 256
        $region64: #{tpu_custom_call.1} parent=55 // pred_fallthru
          _
        // Predicated region
        $region65: #{tpu_custom_call.1} parent=55 // pred_check
          %p392 = pneg %p124
        $region66: #{tpu_custom_call.1} parent=55 // pred_check_branch
          %394 = sbr.rel (%p392) target = $region68
        $region67: #{tpu_custom_call.1} parent=55 // pred_region
          %395 = dma.done [#allocation6], 2048
        $region68: #{tpu_custom_call.1} parent=55 // pred_fallthru
          _
        // Predicated region
        $region69: #{tpu_custom_call.1} parent=55 // pred_check
          %p396 = pneg %p166
        $region70: #{tpu_custom_call.1} parent=55 // pred_check_branch
          %398 = sbr.rel (%p396) target = $region72
        $region71: #{tpu_custom_call.1} parent=55 // pred_region
          %399 = dma.done [#allocation9], 4096
        $region72: #{tpu_custom_call.1} parent=55 // pred_fallthru
          _
        // Predicated region
        $region73: #{tpu_custom_call.1} parent=55 // pred_check
          %p400 = pneg %p208
        $region74: #{tpu_custom_call.1} parent=55 // pred_check_branch
          %402 = sbr.rel (%p400) target = $region76
        $region75: #{tpu_custom_call.1} parent=55 // pred_region
          %403 = dma.done [#allocation9], 2048
        $region76: #{tpu_custom_call.1} parent=55 // pred_fallthru
          _
        %s404 = sand.u32 %s38, 1
        %s405 = scalar_lea.sflag [#allocation3], %s404
        %s406 = sand.u32 %s38, 1
        %s407 = smul.addr %s406, 8
        %s408 = scalar_lea.vmem [#allocation2], %s407
        %p409 = pneg %p51
        %p410 = pneg %p48
        %s411 = sand.u32 %s30, 1
        %s412 = scalar_lea.sflag [#allocation6], %s411
        %s413 = sand.u32 %s64, 1
        %s414 = smul.addr %s413, 16
        %s415 = scalar_lea.vmem [#allocation5], %s414
        %p416 = pneg %p77
        %p417 = pneg %p74
        %p418 = scmp.lt.s32.totalorder %s30, 1
        %s419 = scalar_select %p418, %s30, 1
        %s420 = scalar_lea.vmem %s2, %s419
        %p421 = pneg %p103
        %p422 = pneg %p100
        %p423 = pneg %p124
        %p424 = pneg %p121
        %p425 = pneg %p145
        %p426 = pneg %p142
        %p427 = pneg %p166
        %p428 = pneg %p163
        %p429 = pneg %p187
        %p430 = pneg %p184
        %p431 = pneg %p208
        %p432 = pneg %p205
        %p433 = pneg %p229
        %p434 = pneg %p226
        %p435 = pneg %p255
        %p436 = pneg %p252
        %s437 = sand.u32 %s242, 1
        %s438 = scalar_lea.sflag [#allocation4], %s437
        %s439 = sand.u32 %s242, 1
        %s440 = smul.addr %s439, 8
        %s441 = scalar_lea.vmem [#allocation11], %s440
        %p442 = scmp.lt.s32.totalorder %s30, 1
        %s443 = scalar_select %p442, %s30, 1
        %s444 = scalar_lea.vmem %s2, %s443
        %v445 = vld [vmem:[%s378] sm:$0xff]
        %v446 = vld [vmem:[%s387] sm:$0xff]
        %v447 = vld [vmem:[%s387 + $0x8] sm:$0xff]
        %v448 = vld [vmem:[%s444] sm:$0x1]
        %v449 = vld [vmem:[#allocation7] sm:$0xff]
        %v450 = vld [vmem:[#allocation7 + $0x8] sm:$0xff]
        %v451 = vld [vmem:[#allocation7 + $0x10] sm:$0xff]
        %v452 = vld [vmem:[#allocation7 + $0x18] sm:$0xff]
        %v453 = vld [vmem:[#allocation7 + $0x20] sm:$0xff]
        %v454 = vld [vmem:[#allocation7 + $0x28] sm:$0xff]
        %v455 = vld [vmem:[#allocation7 + $0x30] sm:$0xff]
        %v456 = vld [vmem:[#allocation7 + $0x38] sm:$0xff]
        %v457 = vld [vmem:[#allocation7 + $0x40] sm:$0xff]
        %v458 = vld [vmem:[#allocation7 + $0x48] sm:$0xff]
        %v459 = vld [vmem:[#allocation7 + $0x50] sm:$0xff]
        %v460 = vld [vmem:[#allocation7 + $0x58] sm:$0xff]
        %v461 = vld [vmem:[#allocation7 + $0x60] sm:$0xff]
        %v462 = vld [vmem:[#allocation7 + $0x68] sm:$0xff]
        %v463 = vld [vmem:[#allocation7 + $0x70] sm:$0xff]
        %v464 = vld [vmem:[#allocation7 + $0x78] sm:$0xff]
        %v465 = vld [vmem:[%s4] sm:$0x1]
        %v467 = vlaneseq
        %v468 = vshrl.u32 %v467, 7
        %v469 = vsub.s32 0, %v468
        %v470 = vrot.slane %v465, %v469
        %472 = vmatprep.subr.mxu0 0.0
        %473 = vmatpush1.xpose.msra.mxu0 %v449
        %474 = vmatprep.subr.mxu0 0.0
        %475 = vmatpush1.xpose.msra.mxu0 %v450
        %476 = vmatprep.subr.mxu0 0.0
        %477 = vmatpush1.xpose.msra.mxu0 %v451
        %478 = vmatprep.subr.mxu0 0.0
        %479 = vmatpush1.xpose.msra.mxu0 %v452
        %480 = vmatprep.subr.mxu0 0.0
        %481 = vmatpush1.xpose.msra.mxu0 %v453
        %482 = vmatprep.subr.mxu0 0.0
        %483 = vmatpush1.xpose.msra.mxu0 %v454
        %484 = vmatprep.subr.mxu0 0.0
        %485 = vmatpush1.xpose.msra.mxu0 %v455
        %486 = vmatprep.subr.mxu0 0.0
        %487 = vmatpush1.xpose.msra.mxu0 %v456
        %488 = vmatprep.subr.mxu0 0.0
        %489 = vmatpush1.xpose.msra.mxu0 %v457
        %490 = vmatprep.subr.mxu0 0.0
        %491 = vmatpush1.xpose.msra.mxu0 %v458
        %492 = vmatprep.subr.mxu0 0.0
        %493 = vmatpush1.xpose.msra.mxu0 %v459
        %494 = vmatprep.subr.mxu0 0.0
        %495 = vmatpush1.xpose.msra.mxu0 %v460
        %496 = vmatprep.subr.mxu0 0.0
        %497 = vmatpush1.xpose.msra.mxu0 %v461
        %498 = vmatprep.subr.mxu0 0.0
        %499 = vmatpush1.xpose.msra.mxu0 %v462
        %500 = vmatprep.subr.mxu0 0.0
        %501 = vmatpush1.xpose.msra.mxu0 %v463
        %502 = vmatprep.subr.mxu0 0.0
        %503 = vmatpush1.xpose.msra.mxu0 %v464
        %504 = vmatprep.subr.mxu0 0.0
        %505 = vmatpush1.xpose.msra.mxu0 0.0
        %506 = vmatprep.subr.mxu0 0.0
        %507 = vmatpush1.xpose.msra.mxu0 0.0
        %508 = vmatprep.subr.mxu0 0.0
        %509 = vmatpush1.xpose.msra.mxu0 0.0
        %510 = vmatprep.subr.mxu0 0.0
        %511 = vmatpush1.xpose.msra.mxu0 0.0
        %512 = vmatprep.subr.mxu0 0.0
        %513 = vmatpush1.xpose.msra.mxu0 0.0
        %514 = vmatprep.subr.mxu0 0.0
        %515 = vmatpush1.xpose.msra.mxu0 0.0
        %516 = vmatprep.subr.mxu0 0.0
        %517 = vmatpush1.xpose.msra.mxu0 0.0
        %518 = vmatprep.subr.mxu0 0.0
        %519 = vmatpush1.xpose.msra.mxu0 0.0
        %520 = vmatprep.subr.mxu0 0.0
        %521 = vmatpush1.xpose.msra.mxu0 0.0
        %522 = vmatprep.subr.mxu0 0.0
        %523 = vmatpush1.xpose.msra.mxu0 0.0
        %524 = vmatprep.subr.mxu0 0.0
        %525 = vmatpush1.xpose.msra.mxu0 0.0
        %526 = vmatprep.subr.mxu0 0.0
        %527 = vmatpush1.xpose.msra.mxu0 0.0
        %528 = vmatprep.subr.mxu0 0.0
        %529 = vmatpush1.xpose.msra.mxu0 0.0
        %530 = vmatprep.subr.mxu0 0.0
        %531 = vmatpush1.xpose.msra.mxu0 0.0
        %532 = vmatprep.subr.mxu0 0.0
        %533 = vmatpush1.xpose.msra.mxu0 0.0
        %534 = vmatprep.subr.mxu0 0.0
        %535 = vmatpush1.xpose.msra.mxu0 0.0
        %536 = vmatprep.mubr.f32.mxu0 0.0
        %537 = vmatmul.mubr.f32.gmra.mrb[0].mxu0 %v445
        %v538 = vpop.f32.mrb[0].mxu0
        %v539 = vadd.f32 %v470, %v538
        %v540 = vpop.f32.mrb[0].mxu0
        %541 = vdwg.mxu0
        %v542 = vld [vmem:[#allocation8] sm:$0xff]
        %v543 = vld [vmem:[#allocation8 + $0x8] sm:$0xff]
        %v544 = vld [vmem:[#allocation8 + $0x10] sm:$0xff]
        %v545 = vld [vmem:[#allocation8 + $0x18] sm:$0xff]
        %v546 = vld [vmem:[#allocation8 + $0x20] sm:$0xff]
        %v547 = vld [vmem:[#allocation8 + $0x28] sm:$0xff]
        %v548 = vld [vmem:[#allocation8 + $0x30] sm:$0xff]
        %v549 = vld [vmem:[#allocation8 + $0x38] sm:$0xff]
        %v550 = vld [vmem:[#allocation8 + $0x40] sm:$0xff]
        %v551 = vld [vmem:[#allocation8 + $0x48] sm:$0xff]
        %v552 = vld [vmem:[#allocation8 + $0x50] sm:$0xff]
        %v553 = vld [vmem:[#allocation8 + $0x58] sm:$0xff]
        %v554 = vld [vmem:[#allocation8 + $0x60] sm:$0xff]
        %v555 = vld [vmem:[#allocation8 + $0x68] sm:$0xff]
        %v556 = vld [vmem:[#allocation8 + $0x70] sm:$0xff]
        %v557 = vld [vmem:[#allocation8 + $0x78] sm:$0xff]
        %v558 = vld [vmem:[#allocation8 + $0x80] sm:$0xff]
        %v559 = vld [vmem:[#allocation8 + $0x88] sm:$0xff]
        %v560 = vld [vmem:[#allocation8 + $0x90] sm:$0xff]
        %v561 = vld [vmem:[#allocation8 + $0x98] sm:$0xff]
        %v562 = vld [vmem:[#allocation8 + $0xa0] sm:$0xff]
        %v563 = vld [vmem:[#allocation8 + $0xa8] sm:$0xff]
        %v564 = vld [vmem:[#allocation8 + $0xb0] sm:$0xff]
        %v565 = vld [vmem:[#allocation8 + $0xb8] sm:$0xff]
        %v566 = vld [vmem:[#allocation8 + $0xc0] sm:$0xff]
        %v567 = vld [vmem:[#allocation8 + $0xc8] sm:$0xff]
        %v568 = vld [vmem:[#allocation8 + $0xd0] sm:$0xff]
        %v569 = vld [vmem:[#allocation8 + $0xd8] sm:$0xff]
        %v570 = vld [vmem:[#allocation8 + $0xe0] sm:$0xff]
        %v571 = vld [vmem:[#allocation8 + $0xe8] sm:$0xff]
        %v572 = vld [vmem:[#allocation8 + $0xf0] sm:$0xff]
        %v573 = vld [vmem:[#allocation8 + $0xf8] sm:$0xff]
        %v574 = vld [vmem:[%s6] sm:$0x3]
        %v576 = vlaneseq
        %v577 = vshrl.u32 %v576, 7
        %v578 = vsub.s32 0, %v577
        %v579 = vrot.slane %v574, %v578
        %v580 = vlaneseq
        %v581 = vshrl.u32 %v580, 7
        %v582 = vsub.s32 1, %v581
        %v583 = vrot.slane %v574, %v582
        %586 = vmatprep.subr.mxu0 0.0
        %587 = vmatpush1.xpose.msra.mxu0 %v542
        %588 = vmatprep.subr.mxu0 0.0
        %589 = vmatpush1.xpose.msra.mxu0 %v543
        %590 = vmatprep.subr.mxu0 0.0
        %591 = vmatpush1.xpose.msra.mxu0 %v544
        %592 = vmatprep.subr.mxu0 0.0
        %593 = vmatpush1.xpose.msra.mxu0 %v545
        %594 = vmatprep.subr.mxu0 0.0
        %595 = vmatpush1.xpose.msra.mxu0 %v546
        %596 = vmatprep.subr.mxu0 0.0
        %597 = vmatpush1.xpose.msra.mxu0 %v547
        %598 = vmatprep.subr.mxu0 0.0
        %599 = vmatpush1.xpose.msra.mxu0 %v548
        %600 = vmatprep.subr.mxu0 0.0
        %601 = vmatpush1.xpose.msra.mxu0 %v549
        %602 = vmatprep.subr.mxu0 0.0
        %603 = vmatpush1.xpose.msra.mxu0 %v550
        %604 = vmatprep.subr.mxu0 0.0
        %605 = vmatpush1.xpose.msra.mxu0 %v551
        %606 = vmatprep.subr.mxu0 0.0
        %607 = vmatpush1.xpose.msra.mxu0 %v552
        %608 = vmatprep.subr.mxu0 0.0
        %609 = vmatpush1.xpose.msra.mxu0 %v553
        %610 = vmatprep.subr.mxu0 0.0
        %611 = vmatpush1.xpose.msra.mxu0 %v554
        %612 = vmatprep.subr.mxu0 0.0
        %613 = vmatpush1.xpose.msra.mxu0 %v555
        %614 = vmatprep.subr.mxu0 0.0
        %615 = vmatpush1.xpose.msra.mxu0 %v556
        %616 = vmatprep.subr.mxu0 0.0
        %617 = vmatpush1.xpose.msra.mxu0 %v557
        %618 = vmatprep.subr.mxu0 0.0
        %619 = vmatpush1.xpose.msra.mxu0 %v558
        %620 = vmatprep.subr.mxu0 0.0
        %621 = vmatpush1.xpose.msra.mxu0 %v559
        %622 = vmatprep.subr.mxu0 0.0
        %623 = vmatpush1.xpose.msra.mxu0 %v560
        %624 = vmatprep.subr.mxu0 0.0
        %625 = vmatpush1.xpose.msra.mxu0 %v561
        %626 = vmatprep.subr.mxu0 0.0
        %627 = vmatpush1.xpose.msra.mxu0 %v562
        %628 = vmatprep.subr.mxu0 0.0
        %629 = vmatpush1.xpose.msra.mxu0 %v563
        %630 = vmatprep.subr.mxu0 0.0
        %631 = vmatpush1.xpose.msra.mxu0 %v564
        %632 = vmatprep.subr.mxu0 0.0
        %633 = vmatpush1.xpose.msra.mxu0 %v565
        %634 = vmatprep.subr.mxu0 0.0
        %635 = vmatpush1.xpose.msra.mxu0 %v566
        %636 = vmatprep.subr.mxu0 0.0
        %637 = vmatpush1.xpose.msra.mxu0 %v567
        %638 = vmatprep.subr.mxu0 0.0
        %639 = vmatpush1.xpose.msra.mxu0 %v568
        %640 = vmatprep.subr.mxu0 0.0
        %641 = vmatpush1.xpose.msra.mxu0 %v569
        %642 = vmatprep.subr.mxu0 0.0
        %643 = vmatpush1.xpose.msra.mxu0 %v570
        %644 = vmatprep.subr.mxu0 0.0
        %645 = vmatpush1.xpose.msra.mxu0 %v571
        %646 = vmatprep.subr.mxu0 0.0
        %647 = vmatpush1.xpose.msra.mxu0 %v572
        %648 = vmatprep.subr.mxu0 0.0
        %649 = vmatpush1.xpose.msra.mxu0 %v573
        %650 = vmatprep.mubr.f32.mxu0 0.0
        %651 = vmatmul.mubr.f32.gmra.mrb[0].mxu0 %v446
        %v652 = vpop.f32.mrb[0].mxu0
        %v653 = vadd.f32 %v579, %v652
        %v654 = vpop.f32.mrb[0].mxu0
        %v655 = vadd.f32 %v583, %v654
        %656 = vmatprep.mubr.f32.mxu0 0.0
        %657 = vmatmul.mubr.f32.gmra.mrb[0].mxu0 %v447
        %v658 = vpop.f32.mrb[0].mxu0
        %v659 = vadd.f32 %v579, %v658
        %v660 = vpop.f32.mrb[0].mxu0
        %v661 = vadd.f32 %v583, %v660
        %662 = vdwg.mxu0
        %vm663 = vcmask 261120
        %v665 = vsel %vm663, %v539, 0
        %v668 = vsel %vm663, %v653, 0
        %v671 = vsel %vm663, %v659, 0
        %673 = vmatprep.subr.mxu0 0.0
        %674 = vmatpush1.xpose.msra.mxu0 %v668
        %675 = vmatprep.subr.mxu0 0.0
        %676 = vmatpush1.xpose.msra.mxu0 %v671
        %677 = vmatprep.subr.mxu0 0.0
        %678 = vmatpush1.xpose.msra.mxu0 0.0
        %679 = vmatprep.subr.mxu0 0.0
        %680 = vmatpush1.xpose.msra.mxu0 0.0
        %681 = vmatprep.subr.mxu0 0.0
        %682 = vmatpush1.xpose.msra.mxu0 0.0
        %683 = vmatprep.subr.mxu0 0.0
        %684 = vmatpush1.xpose.msra.mxu0 0.0
        %685 = vmatprep.subr.mxu0 0.0
        %686 = vmatpush1.xpose.msra.mxu0 0.0
        %687 = vmatprep.subr.mxu0 0.0
        %688 = vmatpush1.xpose.msra.mxu0 0.0
        %689 = vmatprep.subr.mxu0 0.0
        %690 = vmatpush1.xpose.msra.mxu0 0.0
        %691 = vmatprep.subr.mxu0 0.0
        %692 = vmatpush1.xpose.msra.mxu0 0.0
        %693 = vmatprep.subr.mxu0 0.0
        %694 = vmatpush1.xpose.msra.mxu0 0.0
        %695 = vmatprep.subr.mxu0 0.0
        %696 = vmatpush1.xpose.msra.mxu0 0.0
        %697 = vmatprep.subr.mxu0 0.0
        %698 = vmatpush1.xpose.msra.mxu0 0.0
        %699 = vmatprep.subr.mxu0 0.0
        %700 = vmatpush1.xpose.msra.mxu0 0.0
        %701 = vmatprep.subr.mxu0 0.0
        %702 = vmatpush1.xpose.msra.mxu0 0.0
        %703 = vmatprep.subr.mxu0 0.0
        %704 = vmatpush1.xpose.msra.mxu0 0.0
        %705 = vmatprep.subr.mxu0 0.0
        %706 = vmatpush1.xpose.msra.mxu0 0.0
        %707 = vmatprep.subr.mxu0 0.0
        %708 = vmatpush1.xpose.msra.mxu0 0.0
        %709 = vmatprep.subr.mxu0 0.0
        %710 = vmatpush1.xpose.msra.mxu0 0.0
        %711 = vmatprep.subr.mxu0 0.0
        %712 = vmatpush1.xpose.msra.mxu0 0.0
        %713 = vmatprep.subr.mxu0 0.0
        %714 = vmatpush1.xpose.msra.mxu0 0.0
        %715 = vmatprep.subr.mxu0 0.0
        %716 = vmatpush1.xpose.msra.mxu0 0.0
        %717 = vmatprep.subr.mxu0 0.0
        %718 = vmatpush1.xpose.msra.mxu0 0.0
        %719 = vmatprep.subr.mxu0 0.0
        %720 = vmatpush1.xpose.msra.mxu0 0.0
        %721 = vmatprep.subr.mxu0 0.0
        %722 = vmatpush1.xpose.msra.mxu0 0.0
        %723 = vmatprep.subr.mxu0 0.0
        %724 = vmatpush1.xpose.msra.mxu0 0.0
        %725 = vmatprep.subr.mxu0 0.0
        %726 = vmatpush1.xpose.msra.mxu0 0.0
        %727 = vmatprep.subr.mxu0 0.0
        %728 = vmatpush1.xpose.msra.mxu0 0.0
        %729 = vmatprep.subr.mxu0 0.0
        %730 = vmatpush1.xpose.msra.mxu0 0.0
        %731 = vmatprep.subr.mxu0 0.0
        %732 = vmatpush1.xpose.msra.mxu0 0.0
        %733 = vmatprep.subr.mxu0 0.0
        %734 = vmatpush1.xpose.msra.mxu0 0.0
        %735 = vmatprep.subr.mxu0 0.0
        %736 = vmatpush1.xpose.msra.mxu0 0.0
        %737 = vmatprep.mubr.f32.mxu0 0.0
        %738 = vmatmul.mubr.f32.gmra.mrb[0].mxu0 %v665
        %v739 = vpop.f32.mrb[0].mxu0
        %v740 = vadd.f32 0.0, %v739
        %v741 = vpop.f32.mrb[0].mxu0
        %742 = vdwg.mxu0
        %v743 = vmul.f32 %v740, 0.17677669
        %vm744 = vcmp.eq.f32.partialorder %v448, 0.0
        %v745 = vsel %vm744, 1, 0
        %v746 = vlaneseq
        %v747 = vshrl.u32 %v746, 7
        %v748 = vsub.s32 0, %v747
        %v749 = vrot.slane %v745, %v748
        %vm750 = vcmp.eq.s32.totalorder %v749, 1
        %v751 = vsel %vm750, -1e+09, %v743
        %vm752 = vcmask 130048
        %v753 = vsel %vm752, %v751, -inf
        %754 = vmax.xlane.f32.xlu0 %v753
        %v755 = vpop.xlane.xlu0 %754
        %v756 = vsub.f32 %v751, %v755
        %v757 = vmul.f32 %v756, 1.442695
        %v758 = vpow.pop %v757
        %v759 = vsel %vm752, %v758, 0.0
        %760 = vadd.xlane.f32.xlu0 %v759
        %v761 = vpop.xlane.xlu0 %760
        %v763 = vsel %vm752, %v758, 0
        %765 = vmatprep.subr.mxu0 0.0
        %766 = vmatpush1.msra.mxu0 %v655
        %767 = vmatprep.subr.mxu0 0.0
        %768 = vmatpush1.msra.mxu0 %v661
        %769 = vmatprep.subr.mxu0 0.0
        %770 = vmatpush1.msra.mxu0 0.0
        %771 = vmatprep.subr.mxu0 0.0
        %772 = vmatpush1.msra.mxu0 0.0
        %773 = vmatprep.subr.mxu0 0.0
        %774 = vmatpush1.msra.mxu0 0.0
        %775 = vmatprep.subr.mxu0 0.0
        %776 = vmatpush1.msra.mxu0 0.0
        %777 = vmatprep.subr.mxu0 0.0
        %778 = vmatpush1.msra.mxu0 0.0
        %779 = vmatprep.subr.mxu0 0.0
        %780 = vmatpush1.msra.mxu0 0.0
        %781 = vmatprep.subr.mxu0 0.0
        %782 = vmatpush1.msra.mxu0 0.0
        %783 = vmatprep.subr.mxu0 0.0
        %784 = vmatpush1.msra.mxu0 0.0
        %785 = vmatprep.subr.mxu0 0.0
        %786 = vmatpush1.msra.mxu0 0.0
        %787 = vmatprep.subr.mxu0 0.0
        %788 = vmatpush1.msra.mxu0 0.0
        %789 = vmatprep.subr.mxu0 0.0
        %790 = vmatpush1.msra.mxu0 0.0
        %791 = vmatprep.subr.mxu0 0.0
        %792 = vmatpush1.msra.mxu0 0.0
        %793 = vmatprep.subr.mxu0 0.0
        %794 = vmatpush1.msra.mxu0 0.0
        %795 = vmatprep.subr.mxu0 0.0
        %796 = vmatpush1.msra.mxu0 0.0
        %797 = vmatprep.subr.mxu0 0.0
        %798 = vmatpush1.msra.mxu0 0.0
        %799 = vmatprep.subr.mxu0 0.0
        %800 = vmatpush1.msra.mxu0 0.0
        %801 = vmatprep.subr.mxu0 0.0
        %802 = vmatpush1.msra.mxu0 0.0
        %803 = vmatprep.subr.mxu0 0.0
        %804 = vmatpush1.msra.mxu0 0.0
        %805 = vmatprep.subr.mxu0 0.0
        %806 = vmatpush1.msra.mxu0 0.0
        %807 = vmatprep.subr.mxu0 0.0
        %808 = vmatpush1.msra.mxu0 0.0
        %809 = vmatprep.subr.mxu0 0.0
        %810 = vmatpush1.msra.mxu0 0.0
        %811 = vmatprep.subr.mxu0 0.0
        %812 = vmatpush1.msra.mxu0 0.0
        %813 = vmatprep.subr.mxu0 0.0
        %814 = vmatpush1.msra.mxu0 0.0
        %815 = vmatprep.subr.mxu0 0.0
        %816 = vmatpush1.msra.mxu0 0.0
        %817 = vmatprep.subr.mxu0 0.0
        %818 = vmatpush1.msra.mxu0 0.0
        %819 = vmatprep.subr.mxu0 0.0
        %820 = vmatpush1.msra.mxu0 0.0
        %821 = vmatprep.subr.mxu0 0.0
        %822 = vmatpush1.msra.mxu0 0.0
        %823 = vmatprep.subr.mxu0 0.0
        %824 = vmatpush1.msra.mxu0 0.0
        %825 = vmatprep.subr.mxu0 0.0
        %826 = vmatpush1.msra.mxu0 0.0
        %827 = vmatprep.subr.mxu0 0.0
        %828 = vmatpush1.msra.mxu0 0.0
        %829 = vmatprep.mubr.f32.mxu0 0.0
        %830 = vmatmul.mubr.f32.gmra.mrb[0].mxu0 %v763
        %v831 = vpop.f32.mrb[0].mxu0
        %v832 = vadd.f32 0.0, %v831
        %v833 = vpop.f32.mrb[0].mxu0
        %834 = vdwg.mxu0
        %v835 = vrcp.pop %v761
        %v836 = vmul.f32 %v832, %v835
        %837 = vrot.lane.b32.xlu0 %v539, 96
        %v838 = vpop.permute.xlu0 %837
        %839 = vrot.lane.b32.xlu0 %v653, 96
        %v840 = vpop.permute.xlu0 %839
        %841 = vrot.lane.b32.xlu0 %v659, 96
        %v842 = vpop.permute.xlu0 %841
        %v843 = vsel %vm663, %v838, 0
        %v845 = vsel %vm663, %v840, 0
        %v847 = vsel %vm663, %v842, 0
        %849 = vmatprep.subr.mxu0 0.0
        %850 = vmatpush1.xpose.msra.mxu0 %v845
        %851 = vmatprep.subr.mxu0 0.0
        %852 = vmatpush1.xpose.msra.mxu0 %v847
        %853 = vmatprep.subr.mxu0 0.0
        %854 = vmatpush1.xpose.msra.mxu0 0.0
        %855 = vmatprep.subr.mxu0 0.0
        %856 = vmatpush1.xpose.msra.mxu0 0.0
        %857 = vmatprep.subr.mxu0 0.0
        %858 = vmatpush1.xpose.msra.mxu0 0.0
        %859 = vmatprep.subr.mxu0 0.0
        %860 = vmatpush1.xpose.msra.mxu0 0.0
        %861 = vmatprep.subr.mxu0 0.0
        %862 = vmatpush1.xpose.msra.mxu0 0.0
        %863 = vmatprep.subr.mxu0 0.0
        %864 = vmatpush1.xpose.msra.mxu0 0.0
        %865 = vmatprep.subr.mxu0 0.0
        %866 = vmatpush1.xpose.msra.mxu0 0.0
        %867 = vmatprep.subr.mxu0 0.0
        %868 = vmatpush1.xpose.msra.mxu0 0.0
        %869 = vmatprep.subr.mxu0 0.0
        %870 = vmatpush1.xpose.msra.mxu0 0.0
        %871 = vmatprep.subr.mxu0 0.0
        %872 = vmatpush1.xpose.msra.mxu0 0.0
        %873 = vmatprep.subr.mxu0 0.0
        %874 = vmatpush1.xpose.msra.mxu0 0.0
        %875 = vmatprep.subr.mxu0 0.0
        %876 = vmatpush1.xpose.msra.mxu0 0.0
        %877 = vmatprep.subr.mxu0 0.0
        %878 = vmatpush1.xpose.msra.mxu0 0.0
        %879 = vmatprep.subr.mxu0 0.0
        %880 = vmatpush1.xpose.msra.mxu0 0.0
        %881 = vmatprep.subr.mxu0 0.0
        %882 = vmatpush1.xpose.msra.mxu0 0.0
        %883 = vmatprep.subr.mxu0 0.0
        %884 = vmatpush1.xpose.msra.mxu0 0.0
        %885 = vmatprep.subr.mxu0 0.0
        %886 = vmatpush1.xpose.msra.mxu0 0.0
        %887 = vmatprep.subr.mxu0 0.0
        %888 = vmatpush1.xpose.msra.mxu0 0.0
        %889 = vmatprep.subr.mxu0 0.0
        %890 = vmatpush1.xpose.msra.mxu0 0.0
        %891 = vmatprep.subr.mxu0 0.0
        %892 = vmatpush1.xpose.msra.mxu0 0.0
        %893 = vmatprep.subr.mxu0 0.0
        %894 = vmatpush1.xpose.msra.mxu0 0.0
        %895 = vmatprep.subr.mxu0 0.0
        %896 = vmatpush1.xpose.msra.mxu0 0.0
        %897 = vmatprep.subr.mxu0 0.0
        %898 = vmatpush1.xpose.msra.mxu0 0.0
        %899 = vmatprep.subr.mxu0 0.0
        %900 = vmatpush1.xpose.msra.mxu0 0.0
        %901 = vmatprep.subr.mxu0 0.0
        %902 = vmatpush1.xpose.msra.mxu0 0.0
        %903 = vmatprep.subr.mxu0 0.0
        %904 = vmatpush1.xpose.msra.mxu0 0.0
        %905 = vmatprep.subr.mxu0 0.0
        %906 = vmatpush1.xpose.msra.mxu0 0.0
        %907 = vmatprep.subr.mxu0 0.0
        %908 = vmatpush1.xpose.msra.mxu0 0.0
        %909 = vmatprep.subr.mxu0 0.0
        %910 = vmatpush1.xpose.msra.mxu0 0.0
        %911 = vmatprep.subr.mxu0 0.0
        %912 = vmatpush1.xpose.msra.mxu0 0.0
        %913 = vmatprep.mubr.f32.mxu0 0.0
        %914 = vmatmul.mubr.f32.gmra.mrb[0].mxu0 %v843
        %v915 = vpop.f32.mrb[0].mxu0
        %v916 = vadd.f32 0.0, %v915
        %v917 = vpop.f32.mrb[0].mxu0
        %918 = vdwg.mxu0
        %v919 = vmul.f32 %v916, 0.17677669
        %v920 = vsel %vm750, -1e+09, %v919
        %v921 = vsel %vm752, %v920, -inf
        %922 = vmax.xlane.f32.xlu0 %v921
        %v923 = vpop.xlane.xlu0 %922
        %v924 = vsub.f32 %v920, %v923
        %v925 = vmul.f32 %v924, 1.442695
        %v926 = vpow.pop %v925
        %v927 = vsel %vm752, %v926, 0.0
        %928 = vadd.xlane.f32.xlu0 %v927
        %v929 = vpop.xlane.xlu0 %928
        %932 = vrot.lane.b32.xlu0 %v655, 96
        %v933 = vpop.permute.xlu0 %932
        %934 = vrot.lane.b32.xlu0 %v661, 96
        %v935 = vpop.permute.xlu0 %934
        %v939 = vsel %vm752, %v926, 0
        %941 = vmatprep.subr.mxu0 0.0
        %942 = vmatpush1.msra.mxu0 %v933
        %943 = vmatprep.subr.mxu0 0.0
        %944 = vmatpush1.msra.mxu0 %v935
        %945 = vmatprep.subr.mxu0 0.0
        %946 = vmatpush1.msra.mxu0 0.0
        %947 = vmatprep.subr.mxu0 0.0
        %948 = vmatpush1.msra.mxu0 0.0
        %949 = vmatprep.subr.mxu0 0.0
        %950 = vmatpush1.msra.mxu0 0.0
        %951 = vmatprep.subr.mxu0 0.0
        %952 = vmatpush1.msra.mxu0 0.0
        %953 = vmatprep.subr.mxu0 0.0
        %954 = vmatpush1.msra.mxu0 0.0
        %955 = vmatprep.subr.mxu0 0.0
        %956 = vmatpush1.msra.mxu0 0.0
        %957 = vmatprep.subr.mxu0 0.0
        %958 = vmatpush1.msra.mxu0 0.0
        %959 = vmatprep.subr.mxu0 0.0
        %960 = vmatpush1.msra.mxu0 0.0
        %961 = vmatprep.subr.mxu0 0.0
        %962 = vmatpush1.msra.mxu0 0.0
        %963 = vmatprep.subr.mxu0 0.0
        %964 = vmatpush1.msra.mxu0 0.0
        %965 = vmatprep.subr.mxu0 0.0
        %966 = vmatpush1.msra.mxu0 0.0
        %967 = vmatprep.subr.mxu0 0.0
        %968 = vmatpush1.msra.mxu0 0.0
        %969 = vmatprep.subr.mxu0 0.0
        %970 = vmatpush1.msra.mxu0 0.0
        %971 = vmatprep.subr.mxu0 0.0
        %972 = vmatpush1.msra.mxu0 0.0
        %973 = vmatprep.subr.mxu0 0.0
        %974 = vmatpush1.msra.mxu0 0.0
        %975 = vmatprep.subr.mxu0 0.0
        %976 = vmatpush1.msra.mxu0 0.0
        %977 = vmatprep.subr.mxu0 0.0
        %978 = vmatpush1.msra.mxu0 0.0
        %979 = vmatprep.subr.mxu0 0.0
        %980 = vmatpush1.msra.mxu0 0.0
        %981 = vmatprep.subr.mxu0 0.0
        %982 = vmatpush1.msra.mxu0 0.0
        %983 = vmatprep.subr.mxu0 0.0
        %984 = vmatpush1.msra.mxu0 0.0
        %985 = vmatprep.subr.mxu0 0.0
        %986 = vmatpush1.msra.mxu0 0.0
        %987 = vmatprep.subr.mxu0 0.0
        %988 = vmatpush1.msra.mxu0 0.0
        %989 = vmatprep.subr.mxu0 0.0
        %990 = vmatpush1.msra.mxu0 0.0
        %991 = vmatprep.subr.mxu0 0.0
        %992 = vmatpush1.msra.mxu0 0.0
        %993 = vmatprep.subr.mxu0 0.0
        %994 = vmatpush1.msra.mxu0 0.0
        %995 = vmatprep.subr.mxu0 0.0
        %996 = vmatpush1.msra.mxu0 0.0
        %997 = vmatprep.subr.mxu0 0.0
        %998 = vmatpush1.msra.mxu0 0.0
        %999 = vmatprep.subr.mxu0 0.0
        %1000 = vmatpush1.msra.mxu0 0.0
        %1001 = vmatprep.subr.mxu0 0.0
        %1002 = vmatpush1.msra.mxu0 0.0
        %1003 = vmatprep.subr.mxu0 0.0
        %1004 = vmatpush1.msra.mxu0 0.0
        %1005 = vmatprep.mubr.f32.mxu0 0.0
        %1006 = vmatmul.mubr.f32.gmra.mrb[0].mxu0 %v939
        %v1007 = vpop.f32.mrb[0].mxu0
        %v1008 = vadd.f32 0.0, %v1007
        %v1009 = vpop.f32.mrb[0].mxu0
        %1010 = vdwg.mxu0
        %v1011 = vrcp.pop %v929
        %v1012 = vmul.f32 %v1008, %v1011
        %1013 = vrot.lane.b32.xlu0 %v539, 64
        %v1014 = vpop.permute.xlu0 %1013
        %1015 = vrot.lane.b32.xlu0 %v653, 64
        %v1016 = vpop.permute.xlu0 %1015
        %1017 = vrot.lane.b32.xlu0 %v659, 64
        %v1018 = vpop.permute.xlu0 %1017
        %v1019 = vsel %vm663, %v1014, 0
        %v1021 = vsel %vm663, %v1016, 0
        %v1023 = vsel %vm663, %v1018, 0
        %1025 = vmatprep.subr.mxu0 0.0
        %1026 = vmatpush1.xpose.msra.mxu0 %v1021
        %1027 = vmatprep.subr.mxu0 0.0
        %1028 = vmatpush1.xpose.msra.mxu0 %v1023
        %1029 = vmatprep.subr.mxu0 0.0
        %1030 = vmatpush1.xpose.msra.mxu0 0.0
        %1031 = vmatprep.subr.mxu0 0.0
        %1032 = vmatpush1.xpose.msra.mxu0 0.0
        %1033 = vmatprep.subr.mxu0 0.0
        %1034 = vmatpush1.xpose.msra.mxu0 0.0
        %1035 = vmatprep.subr.mxu0 0.0
        %1036 = vmatpush1.xpose.msra.mxu0 0.0
        %1037 = vmatprep.subr.mxu0 0.0
        %1038 = vmatpush1.xpose.msra.mxu0 0.0
        %1039 = vmatprep.subr.mxu0 0.0
        %1040 = vmatpush1.xpose.msra.mxu0 0.0
        %1041 = vmatprep.subr.mxu0 0.0
        %1042 = vmatpush1.xpose.msra.mxu0 0.0
        %1043 = vmatprep.subr.mxu0 0.0
        %1044 = vmatpush1.xpose.msra.mxu0 0.0
        %1045 = vmatprep.subr.mxu0 0.0
        %1046 = vmatpush1.xpose.msra.mxu0 0.0
        %1047 = vmatprep.subr.mxu0 0.0
        %1048 = vmatpush1.xpose.msra.mxu0 0.0
        %1049 = vmatprep.subr.mxu0 0.0
        %1050 = vmatpush1.xpose.msra.mxu0 0.0
        %1051 = vmatprep.subr.mxu0 0.0
        %1052 = vmatpush1.xpose.msra.mxu0 0.0
        %1053 = vmatprep.subr.mxu0 0.0
        %1054 = vmatpush1.xpose.msra.mxu0 0.0
        %1055 = vmatprep.subr.mxu0 0.0
        %1056 = vmatpush1.xpose.msra.mxu0 0.0
        %1057 = vmatprep.subr.mxu0 0.0
        %1058 = vmatpush1.xpose.msra.mxu0 0.0
        %1059 = vmatprep.subr.mxu0 0.0
        %1060 = vmatpush1.xpose.msra.mxu0 0.0
        %1061 = vmatprep.subr.mxu0 0.0
        %1062 = vmatpush1.xpose.msra.mxu0 0.0
        %1063 = vmatprep.subr.mxu0 0.0
        %1064 = vmatpush1.xpose.msra.mxu0 0.0
        %1065 = vmatprep.subr.mxu0 0.0
        %1066 = vmatpush1.xpose.msra.mxu0 0.0
        %1067 = vmatprep.subr.mxu0 0.0
        %1068 = vmatpush1.xpose.msra.mxu0 0.0
        %1069 = vmatprep.subr.mxu0 0.0
        %1070 = vmatpush1.xpose.msra.mxu0 0.0
        %1071 = vmatprep.subr.mxu0 0.0
        %1072 = vmatpush1.xpose.msra.mxu0 0.0
        %1073 = vmatprep.subr.mxu0 0.0
        %1074 = vmatpush1.xpose.msra.mxu0 0.0
        %1075 = vmatprep.subr.mxu0 0.0
        %1076 = vmatpush1.xpose.msra.mxu0 0.0
        %1077 = vmatprep.subr.mxu0 0.0
        %1078 = vmatpush1.xpose.msra.mxu0 0.0
        %1079 = vmatprep.subr.mxu0 0.0
        %1080 = vmatpush1.xpose.msra.mxu0 0.0
        %1081 = vmatprep.subr.mxu0 0.0
        %1082 = vmatpush1.xpose.msra.mxu0 0.0
        %1083 = vmatprep.subr.mxu0 0.0
        %1084 = vmatpush1.xpose.msra.mxu0 0.0
        %1085 = vmatprep.subr.mxu0 0.0
        %1086 = vmatpush1.xpose.msra.mxu0 0.0
        %1087 = vmatprep.subr.mxu0 0.0
        %1088 = vmatpush1.xpose.msra.mxu0 0.0
        %1089 = vmatprep.mubr.f32.mxu0 0.0
        %1090 = vmatmul.mubr.f32.gmra.mrb[0].mxu0 %v1019
        %v1091 = vpop.f32.mrb[0].mxu0
        %v1092 = vadd.f32 0.0, %v1091
        %v1093 = vpop.f32.mrb[0].mxu0
        %1094 = vdwg.mxu0
        %v1095 = vmul.f32 %v1092, 0.17677669
        %v1096 = vsel %vm750, -1e+09, %v1095
        %v1097 = vsel %vm752, %v1096, -inf
        %1098 = vmax.xlane.f32.xlu0 %v1097
        %v1099 = vpop.xlane.xlu0 %1098
        %v1100 = vsub.f32 %v1096, %v1099
        %v1101 = vmul.f32 %v1100, 1.442695
        %v1102 = vpow.pop %v1101
        %v1103 = vsel %vm752, %v1102, 0.0
        %1104 = vadd.xlane.f32.xlu0 %v1103
        %v1105 = vpop.xlane.xlu0 %1104
        %1106 = vrot.lane.b32.xlu0 %v655, 64
        %v1107 = vpop.permute.xlu0 %1106
        %1108 = vrot.lane.b32.xlu0 %v661, 64
        %v1109 = vpop.permute.xlu0 %1108
        %v1113 = vsel %vm752, %v1102, 0
        %1115 = vmatprep.subr.mxu0 0.0
        %1116 = vmatpush1.msra.mxu0 %v1107
        %1117 = vmatprep.subr.mxu0 0.0
        %1118 = vmatpush1.msra.mxu0 %v1109
        %1119 = vmatprep.subr.mxu0 0.0
        %1120 = vmatpush1.msra.mxu0 0.0
        %1121 = vmatprep.subr.mxu0 0.0
        %1122 = vmatpush1.msra.mxu0 0.0
        %1123 = vmatprep.subr.mxu0 0.0
        %1124 = vmatpush1.msra.mxu0 0.0
        %1125 = vmatprep.subr.mxu0 0.0
        %1126 = vmatpush1.msra.mxu0 0.0
        %1127 = vmatprep.subr.mxu0 0.0
        %1128 = vmatpush1.msra.mxu0 0.0
        %1129 = vmatprep.subr.mxu0 0.0
        %1130 = vmatpush1.msra.mxu0 0.0
        %1131 = vmatprep.subr.mxu0 0.0
        %1132 = vmatpush1.msra.mxu0 0.0
        %1133 = vmatprep.subr.mxu0 0.0
        %1134 = vmatpush1.msra.mxu0 0.0
        %1135 = vmatprep.subr.mxu0 0.0
        %1136 = vmatpush1.msra.mxu0 0.0
        %1137 = vmatprep.subr.mxu0 0.0
        %1138 = vmatpush1.msra.mxu0 0.0
        %1139 = vmatprep.subr.mxu0 0.0
        %1140 = vmatpush1.msra.mxu0 0.0
        %1141 = vmatprep.subr.mxu0 0.0
        %1142 = vmatpush1.msra.mxu0 0.0
        %1143 = vmatprep.subr.mxu0 0.0
        %1144 = vmatpush1.msra.mxu0 0.0
        %1145 = vmatprep.subr.mxu0 0.0
        %1146 = vmatpush1.msra.mxu0 0.0
        %1147 = vmatprep.subr.mxu0 0.0
        %1148 = vmatpush1.msra.mxu0 0.0
        %1149 = vmatprep.subr.mxu0 0.0
        %1150 = vmatpush1.msra.mxu0 0.0
        %1151 = vmatprep.subr.mxu0 0.0
        %1152 = vmatpush1.msra.mxu0 0.0
        %1153 = vmatprep.subr.mxu0 0.0
        %1154 = vmatpush1.msra.mxu0 0.0
        %1155 = vmatprep.subr.mxu0 0.0
        %1156 = vmatpush1.msra.mxu0 0.0
        %1157 = vmatprep.subr.mxu0 0.0
        %1158 = vmatpush1.msra.mxu0 0.0
        %1159 = vmatprep.subr.mxu0 0.0
        %1160 = vmatpush1.msra.mxu0 0.0
        %1161 = vmatprep.subr.mxu0 0.0
        %1162 = vmatpush1.msra.mxu0 0.0
        %1163 = vmatprep.subr.mxu0 0.0
        %1164 = vmatpush1.msra.mxu0 0.0
        %1165 = vmatprep.subr.mxu0 0.0
        %1166 = vmatpush1.msra.mxu0 0.0
        %1167 = vmatprep.subr.mxu0 0.0
        %1168 = vmatpush1.msra.mxu0 0.0
        %1169 = vmatprep.subr.mxu0 0.0
        %1170 = vmatpush1.msra.mxu0 0.0
        %1171 = vmatprep.subr.mxu0 0.0
        %1172 = vmatpush1.msra.mxu0 0.0
        %1173 = vmatprep.subr.mxu0 0.0
        %1174 = vmatpush1.msra.mxu0 0.0
        %1175 = vmatprep.subr.mxu0 0.0
        %1176 = vmatpush1.msra.mxu0 0.0
        %1177 = vmatprep.subr.mxu0 0.0
        %1178 = vmatpush1.msra.mxu0 0.0
        %1179 = vmatprep.mubr.f32.mxu0 0.0
        %1180 = vmatmul.mubr.f32.gmra.mrb[0].mxu0 %v1113
        %v1181 = vpop.f32.mrb[0].mxu0
        %v1182 = vadd.f32 0.0, %v1181
        %v1183 = vpop.f32.mrb[0].mxu0
        %1184 = vdwg.mxu0
        %v1185 = vrcp.pop %v1105
        %v1186 = vmul.f32 %v1182, %v1185
        %1187 = vrot.lane.b32.xlu0 %v539, 32
        %v1188 = vpop.permute.xlu0 %1187
        %1189 = vrot.lane.b32.xlu0 %v653, 32
        %v1190 = vpop.permute.xlu0 %1189
        %1191 = vrot.lane.b32.xlu0 %v659, 32
        %v1192 = vpop.permute.xlu0 %1191
        %v1193 = vsel %vm663, %v1188, 0
        %v1195 = vsel %vm663, %v1190, 0
        %v1197 = vsel %vm663, %v1192, 0
        %1199 = vmatprep.subr.mxu0 0.0
        %1200 = vmatpush1.xpose.msra.mxu0 %v1195
        %1201 = vmatprep.subr.mxu0 0.0
        %1202 = vmatpush1.xpose.msra.mxu0 %v1197
        %1203 = vmatprep.subr.mxu0 0.0
        %1204 = vmatpush1.xpose.msra.mxu0 0.0
        %1205 = vmatprep.subr.mxu0 0.0
        %1206 = vmatpush1.xpose.msra.mxu0 0.0
        %1207 = vmatprep.subr.mxu0 0.0
        %1208 = vmatpush1.xpose.msra.mxu0 0.0
        %1209 = vmatprep.subr.mxu0 0.0
        %1210 = vmatpush1.xpose.msra.mxu0 0.0
        %1211 = vmatprep.subr.mxu0 0.0
        %1212 = vmatpush1.xpose.msra.mxu0 0.0
        %1213 = vmatprep.subr.mxu0 0.0
        %1214 = vmatpush1.xpose.msra.mxu0 0.0
        %1215 = vmatprep.subr.mxu0 0.0
        %1216 = vmatpush1.xpose.msra.mxu0 0.0
        %1217 = vmatprep.subr.mxu0 0.0
        %1218 = vmatpush1.xpose.msra.mxu0 0.0
        %1219 = vmatprep.subr.mxu0 0.0
        %1220 = vmatpush1.xpose.msra.mxu0 0.0
        %1221 = vmatprep.subr.mxu0 0.0
        %1222 = vmatpush1.xpose.msra.mxu0 0.0
        %1223 = vmatprep.subr.mxu0 0.0
        %1224 = vmatpush1.xpose.msra.mxu0 0.0
        %1225 = vmatprep.subr.mxu0 0.0
        %1226 = vmatpush1.xpose.msra.mxu0 0.0
        %1227 = vmatprep.subr.mxu0 0.0
        %1228 = vmatpush1.xpose.msra.mxu0 0.0
        %1229 = vmatprep.subr.mxu0 0.0
        %1230 = vmatpush1.xpose.msra.mxu0 0.0
        %1231 = vmatprep.subr.mxu0 0.0
        %1232 = vmatpush1.xpose.msra.mxu0 0.0
        %1233 = vmatprep.subr.mxu0 0.0
        %1234 = vmatpush1.xpose.msra.mxu0 0.0
        %1235 = vmatprep.subr.mxu0 0.0
        %1236 = vmatpush1.xpose.msra.mxu0 0.0
        %1237 = vmatprep.subr.mxu0 0.0
        %1238 = vmatpush1.xpose.msra.mxu0 0.0
        %1239 = vmatprep.subr.mxu0 0.0
        %1240 = vmatpush1.xpose.msra.mxu0 0.0
        %1241 = vmatprep.subr.mxu0 0.0
        %1242 = vmatpush1.xpose.msra.mxu0 0.0
        %1243 = vmatprep.subr.mxu0 0.0
        %1244 = vmatpush1.xpose.msra.mxu0 0.0
        %1245 = vmatprep.subr.mxu0 0.0
        %1246 = vmatpush1.xpose.msra.mxu0 0.0
        %1247 = vmatprep.subr.mxu0 0.0
        %1248 = vmatpush1.xpose.msra.mxu0 0.0
        %1249 = vmatprep.subr.mxu0 0.0
        %1250 = vmatpush1.xpose.msra.mxu0 0.0
        %1251 = vmatprep.subr.mxu0 0.0
        %1252 = vmatpush1.xpose.msra.mxu0 0.0
        %1253 = vmatprep.subr.mxu0 0.0
        %1254 = vmatpush1.xpose.msra.mxu0 0.0
        %1255 = vmatprep.subr.mxu0 0.0
        %1256 = vmatpush1.xpose.msra.mxu0 0.0
        %1257 = vmatprep.subr.mxu0 0.0
        %1258 = vmatpush1.xpose.msra.mxu0 0.0
        %1259 = vmatprep.subr.mxu0 0.0
        %1260 = vmatpush1.xpose.msra.mxu0 0.0
        %1261 = vmatprep.subr.mxu0 0.0
        %1262 = vmatpush1.xpose.msra.mxu0 0.0
        %1263 = vmatprep.mubr.f32.mxu0 0.0
        %1264 = vmatmul.mubr.f32.gmra.mrb[0].mxu0 %v1193
        %v1265 = vpop.f32.mrb[0].mxu0
        %v1266 = vadd.f32 0.0, %v1265
        %v1267 = vpop.f32.mrb[0].mxu0
        %1268 = vdwg.mxu0
        %v1269 = vmul.f32 %v1266, 0.17677669
        %v1270 = vsel %vm750, -1e+09, %v1269
        %v1271 = vsel %vm752, %v1270, -inf
        %1272 = vmax.xlane.f32.xlu0 %v1271
        %v1273 = vpop.xlane.xlu0 %1272
        %v1274 = vsub.f32 %v1270, %v1273
        %v1275 = vmul.f32 %v1274, 1.442695
        %v1276 = vpow.pop %v1275
        %v1277 = vsel %vm752, %v1276, 0.0
        %1278 = vadd.xlane.f32.xlu0 %v1277
        %v1279 = vpop.xlane.xlu0 %1278
        %1280 = vrot.lane.b32.xlu0 %v655, 32
        %v1281 = vpop.permute.xlu0 %1280
        %1282 = vrot.lane.b32.xlu0 %v661, 32
        %v1283 = vpop.permute.xlu0 %1282
        %v1287 = vsel %vm752, %v1276, 0
        %1289 = vmatprep.subr.mxu0 0.0
        %1290 = vmatpush1.msra.mxu0 %v1281
        %1291 = vmatprep.subr.mxu0 0.0
        %1292 = vmatpush1.msra.mxu0 %v1283
        %1293 = vmatprep.subr.mxu0 0.0
        %1294 = vmatpush1.msra.mxu0 0.0
        %1295 = vmatprep.subr.mxu0 0.0
        %1296 = vmatpush1.msra.mxu0 0.0
        %1297 = vmatprep.subr.mxu0 0.0
        %1298 = vmatpush1.msra.mxu0 0.0
        %1299 = vmatprep.subr.mxu0 0.0
        %1300 = vmatpush1.msra.mxu0 0.0
        %1301 = vmatprep.subr.mxu0 0.0
        %1302 = vmatpush1.msra.mxu0 0.0
        %1303 = vmatprep.subr.mxu0 0.0
        %1304 = vmatpush1.msra.mxu0 0.0
        %1305 = vmatprep.subr.mxu0 0.0
        %1306 = vmatpush1.msra.mxu0 0.0
        %1307 = vmatprep.subr.mxu0 0.0
        %1308 = vmatpush1.msra.mxu0 0.0
        %1309 = vmatprep.subr.mxu0 0.0
        %1310 = vmatpush1.msra.mxu0 0.0
        %1311 = vmatprep.subr.mxu0 0.0
        %1312 = vmatpush1.msra.mxu0 0.0
        %1313 = vmatprep.subr.mxu0 0.0
        %1314 = vmatpush1.msra.mxu0 0.0
        %1315 = vmatprep.subr.mxu0 0.0
        %1316 = vmatpush1.msra.mxu0 0.0
        %1317 = vmatprep.subr.mxu0 0.0
        %1318 = vmatpush1.msra.mxu0 0.0
        %1319 = vmatprep.subr.mxu0 0.0
        %1320 = vmatpush1.msra.mxu0 0.0
        %1321 = vmatprep.subr.mxu0 0.0
        %1322 = vmatpush1.msra.mxu0 0.0
        %1323 = vmatprep.subr.mxu0 0.0
        %1324 = vmatpush1.msra.mxu0 0.0
        %1325 = vmatprep.subr.mxu0 0.0
        %1326 = vmatpush1.msra.mxu0 0.0
        %1327 = vmatprep.subr.mxu0 0.0
        %1328 = vmatpush1.msra.mxu0 0.0
        %1329 = vmatprep.subr.mxu0 0.0
        %1330 = vmatpush1.msra.mxu0 0.0
        %1331 = vmatprep.subr.mxu0 0.0
        %1332 = vmatpush1.msra.mxu0 0.0
        %1333 = vmatprep.subr.mxu0 0.0
        %1334 = vmatpush1.msra.mxu0 0.0
        %1335 = vmatprep.subr.mxu0 0.0
        %1336 = vmatpush1.msra.mxu0 0.0
        %1337 = vmatprep.subr.mxu0 0.0
        %1338 = vmatpush1.msra.mxu0 0.0
        %1339 = vmatprep.subr.mxu0 0.0
        %1340 = vmatpush1.msra.mxu0 0.0
        %1341 = vmatprep.subr.mxu0 0.0
        %1342 = vmatpush1.msra.mxu0 0.0
        %1343 = vmatprep.subr.mxu0 0.0
        %1344 = vmatpush1.msra.mxu0 0.0
        %1345 = vmatprep.subr.mxu0 0.0
        %1346 = vmatpush1.msra.mxu0 0.0
        %1347 = vmatprep.subr.mxu0 0.0
        %1348 = vmatpush1.msra.mxu0 0.0
        %1349 = vmatprep.subr.mxu0 0.0
        %1350 = vmatpush1.msra.mxu0 0.0
        %1351 = vmatprep.subr.mxu0 0.0
        %1352 = vmatpush1.msra.mxu0 0.0
        %1353 = vmatprep.mubr.f32.mxu0 0.0
        %1354 = vmatmul.mubr.f32.gmra.mrb[0].mxu0 %v1287
        %v1355 = vpop.f32.mrb[0].mxu0
        %v1356 = vadd.f32 0.0, %v1355
        %v1357 = vpop.f32.mrb[0].mxu0
        %1358 = vdwg.mxu0
        %v1359 = vrcp.pop %v1279
        %v1360 = vmul.f32 %v1356, %v1359
        %1362 = vrot.lane.b32.xlu0 %v1012, 32
        %v1363 = vpop.permute.xlu0 %1362
        %1366 = vrot.lane.b32.xlu0 %v1186, 64
        %v1367 = vpop.permute.xlu0 %1366
        %1370 = vrot.lane.b32.xlu0 %v1360, 96
        %v1371 = vpop.permute.xlu0 %1370
        %v1373 = vsel %vm663, %v836, %v1363
        %vm1374 = vcmask 523264
        %v1375 = vsel %vm1374, %v1373, %v1367
        %vm1376 = vcmask 785408
        %v1377 = vsel %vm1376, %v1375, %v1371
        %v1378 = vld [vmem:[#allocation10] sm:$0xff]
        %v1379 = vld [vmem:[#allocation10 + $0x8] sm:$0xff]
        %v1380 = vld [vmem:[#allocation10 + $0x10] sm:$0xff]
        %v1381 = vld [vmem:[#allocation10 + $0x18] sm:$0xff]
        %v1382 = vld [vmem:[#allocation10 + $0x20] sm:$0xff]
        %v1383 = vld [vmem:[#allocation10 + $0x28] sm:$0xff]
        %v1384 = vld [vmem:[#allocation10 + $0x30] sm:$0xff]
        %v1385 = vld [vmem:[#allocation10 + $0x38] sm:$0xff]
        %v1386 = vld [vmem:[#allocation10 + $0x40] sm:$0xff]
        %v1387 = vld [vmem:[#allocation10 + $0x48] sm:$0xff]
        %v1388 = vld [vmem:[#allocation10 + $0x50] sm:$0xff]
        %v1389 = vld [vmem:[#allocation10 + $0x58] sm:$0xff]
        %v1390 = vld [vmem:[#allocation10 + $0x60] sm:$0xff]
        %v1391 = vld [vmem:[#allocation10 + $0x68] sm:$0xff]
        %v1392 = vld [vmem:[#allocation10 + $0x70] sm:$0xff]
        %v1393 = vld [vmem:[#allocation10 + $0x78] sm:$0xff]
        %v1394 = vld [vmem:[%s8] sm:$0x1]
        %v1396 = vlaneseq
        %v1397 = vshrl.u32 %v1396, 7
        %v1398 = vsub.s32 0, %v1397
        %v1399 = vrot.slane %v1394, %v1398
        %1401 = vmatprep.subr.mxu0 0.0
        %1402 = vmatpush1.xpose.msra.mxu0 %v1378
        %1403 = vmatprep.subr.mxu0 0.0
        %1404 = vmatpush1.xpose.msra.mxu0 %v1379
        %1405 = vmatprep.subr.mxu0 0.0
        %1406 = vmatpush1.xpose.msra.mxu0 %v1380
        %1407 = vmatprep.subr.mxu0 0.0
        %1408 = vmatpush1.xpose.msra.mxu0 %v1381
        %1409 = vmatprep.subr.mxu0 0.0
        %1410 = vmatpush1.xpose.msra.mxu0 %v1382
        %1411 = vmatprep.subr.mxu0 0.0
        %1412 = vmatpush1.xpose.msra.mxu0 %v1383
        %1413 = vmatprep.subr.mxu0 0.0
        %1414 = vmatpush1.xpose.msra.mxu0 %v1384
        %1415 = vmatprep.subr.mxu0 0.0
        %1416 = vmatpush1.xpose.msra.mxu0 %v1385
        %1417 = vmatprep.subr.mxu0 0.0
        %1418 = vmatpush1.xpose.msra.mxu0 %v1386
        %1419 = vmatprep.subr.mxu0 0.0
        %1420 = vmatpush1.xpose.msra.mxu0 %v1387
        %1421 = vmatprep.subr.mxu0 0.0
        %1422 = vmatpush1.xpose.msra.mxu0 %v1388
        %1423 = vmatprep.subr.mxu0 0.0
        %1424 = vmatpush1.xpose.msra.mxu0 %v1389
        %1425 = vmatprep.subr.mxu0 0.0
        %1426 = vmatpush1.xpose.msra.mxu0 %v1390
        %1427 = vmatprep.subr.mxu0 0.0
        %1428 = vmatpush1.xpose.msra.mxu0 %v1391
        %1429 = vmatprep.subr.mxu0 0.0
        %1430 = vmatpush1.xpose.msra.mxu0 %v1392
        %1431 = vmatprep.subr.mxu0 0.0
        %1432 = vmatpush1.xpose.msra.mxu0 %v1393
        %1433 = vmatprep.subr.mxu0 0.0
        %1434 = vmatpush1.xpose.msra.mxu0 0.0
        %1435 = vmatprep.subr.mxu0 0.0
        %1436 = vmatpush1.xpose.msra.mxu0 0.0
        %1437 = vmatprep.subr.mxu0 0.0
        %1438 = vmatpush1.xpose.msra.mxu0 0.0
        %1439 = vmatprep.subr.mxu0 0.0
        %1440 = vmatpush1.xpose.msra.mxu0 0.0
        %1441 = vmatprep.subr.mxu0 0.0
        %1442 = vmatpush1.xpose.msra.mxu0 0.0
        %1443 = vmatprep.subr.mxu0 0.0
        %1444 = vmatpush1.xpose.msra.mxu0 0.0
        %1445 = vmatprep.subr.mxu0 0.0
        %1446 = vmatpush1.xpose.msra.mxu0 0.0
        %1447 = vmatprep.subr.mxu0 0.0
        %1448 = vmatpush1.xpose.msra.mxu0 0.0
        %1449 = vmatprep.subr.mxu0 0.0
        %1450 = vmatpush1.xpose.msra.mxu0 0.0
        %1451 = vmatprep.subr.mxu0 0.0
        %1452 = vmatpush1.xpose.msra.mxu0 0.0
        %1453 = vmatprep.subr.mxu0 0.0
        %1454 = vmatpush1.xpose.msra.mxu0 0.0
        %1455 = vmatprep.subr.mxu0 0.0
        %1456 = vmatpush1.xpose.msra.mxu0 0.0
        %1457 = vmatprep.subr.mxu0 0.0
        %1458 = vmatpush1.xpose.msra.mxu0 0.0
        %1459 = vmatprep.subr.mxu0 0.0
        %1460 = vmatpush1.xpose.msra.mxu0 0.0
        %1461 = vmatprep.subr.mxu0 0.0
        %1462 = vmatpush1.xpose.msra.mxu0 0.0
        %1463 = vmatprep.subr.mxu0 0.0
        %1464 = vmatpush1.xpose.msra.mxu0 0.0
        %1465 = vmatprep.mubr.f32.mxu0 0.0
        %1466 = vmatmul.mubr.f32.gmra.mrb[0].mxu0 %v1377
        %v1467 = vpop.f32.mrb[0].mxu0
        %v1468 = vadd.f32 %v1399, %v1467
        %v1469 = vpop.f32.mrb[0].mxu0
        %1470 = vdwg.mxu0
        %1471 = vst [vmem:[%s441] sm:$0xff] %v1468
        %s1472 = sand.u32 %s242, 1
        %s1473 = scalar_lea.sflag [#allocation4], %s1472
        %s1474 = sand.u32 %s242, 1
        %s1475 = smul.addr %s1474, 8
        %s1476 = scalar_lea.vmem [#allocation11], %s1475
        // Predicated region
        $region77: #{tpu_custom_call.1} parent=55 // pred_check
          %p1477 = pneg %p252
        $region78: #{tpu_custom_call.1} parent=55 // pred_check_branch
          %1479 = sbr.rel (%p1477) target = $region80
        $region79: #{tpu_custom_call.1} parent=55 // pred_region
          %s1481 = ssub.s32 128, 128
          %1482 = vsyncadd %s1473, %s1481
          %s1483 = smul.addr %s30, 128
          %s1484 = scalar_lea.hbm %s9, %s1483
          %s1486 = sshll.u32 %s1476, 4
          %s1487 = int_to_ptr.vmem [resolvable:$true] %s1486
          %1489 = dma.vmem_to_hbm [thread:$0]  %s1487, 128, %s1484, %s1473
        $region80: #{tpu_custom_call.1} parent=55 // pred_fallthru
          _
      $region56: #{tpu_custom_call.1} parent=5 // pred_fallthru
        _
      %p1490 = scmp.le.s32.totalorder 2, %s25
      // Predicated region
      $region81: #{tpu_custom_call.1} parent=5 // pred_check
        %p1491 = pneg %p1490
      $region82: #{tpu_custom_call.1} parent=5 // pred_check_branch
        %1493 = sbr.rel (%p1491) target = $region84
      $region83: #{tpu_custom_call.1} parent=5 // pred_region
        %s1494 = ssub.s32 %s25, 2
        // Predicated region
        $region85: #{tpu_custom_call.1} parent=83 // pred_check
          %p1495 = pneg %p258
        $region86: #{tpu_custom_call.1} parent=83 // pred_check_branch
          %1497 = sbr.rel (%p1495) target = $region88
        $region87: #{tpu_custom_call.1} parent=83 // pred_region
          %s1498 = sand.u32 %s243, 1
          %s1499 = scalar_lea.sflag [#allocation4], %s1498
          %s1500 = sand.u32 %s243, 1
          %s1501 = smul.addr %s1500, 8
          %s1502 = scalar_lea.vmem [#allocation11], %s1501
          %1503 = dma.done %s1499, 128
        $region88: #{tpu_custom_call.1} parent=83 // pred_fallthru
          _
      $region84: #{tpu_custom_call.1} parent=5 // pred_fallthru
        _
    $region6: #{tpu_custom_call.1} parent=1 // loop_footer
      %s29 = sadd.s32 1, %s25
    $region7: #{tpu_custom_call.1} parent=1 // loop_footer_branch
      %24 = sbr.rel target = $region3
    $region8: #{tpu_custom_call.1} parent=1 // loop_exit
      _
    %1504 = vsyncpa [#allocation3], 1
    %s1505 = scalar_lea.sflag [#allocation3], 1
    %1506 = vsyncpa %s1505, 1
    %1507 = vsyncpa [#allocation6], 1
    %s1508 = scalar_lea.sflag [#allocation6], 1
    %1509 = vsyncpa %s1508, 1
    %1510 = vsyncpa [#allocation9], 1
    %1511 = vsyncpa [#allocation4], 1
    %s1512 = scalar_lea.sflag [#allocation4], 1
    %1513 = vsyncpa %s1512, 1

</llo_original>
